<compile_context>
chip_gen: v5e
topology: v5e:2x2
jax: 0.10.0
libtpu: 0.0.40
codegen_flags: <defaults>
</compile_context>

<pallas_src>
import functools

import jax
import jax.numpy as jnp
from jax.experimental import pallas as pl
from jax.experimental.pallas import tpu as pltpu

# --- logical network dims (from the module __init__) ---
D_IN = 28 * 28   # 784
D_H1 = 256
D_H2 = 128
D_H3 = 64
D_OUT = 10

# --- padded (lane-dense) dims used inside the kernel ---
D_IN_P = 896     # 7 * 128
D_H3_P = 128
D_OUT_P = 128

DEFAULT_TB = 512  # batch tile; multiple of 128 (MXU rows / bf16 sublane packing)


def _mlp_kernel(x_ref,
                w1_ref, b1_ref,
                w2_ref, b2_ref,
                w3_ref, b3_ref,
                w4_ref, b4_ref,
                o_ref):
    """Fused 4-layer MLP forward for one (TB, 896) batch tile.

    Weights/activations are bf16 (MXU-native); accumulation and bias adds are
    fp32. All padded regions of the weights/biases are zero, so padding never
    perturbs the logical 10 output columns.
    """
    x = x_ref[...]                                                    # bf16 (TB, 896)

    h = jnp.dot(x, w1_ref[...], preferred_element_type=jnp.float32)  # (TB, 256) f32
    h = jnp.maximum(h + b1_ref[...], 0.0).astype(jnp.bfloat16)

    h = jnp.dot(h, w2_ref[...], preferred_element_type=jnp.float32)  # (TB, 128) f32
    h = jnp.maximum(h + b2_ref[...], 0.0).astype(jnp.bfloat16)

    h = jnp.dot(h, w3_ref[...], preferred_element_type=jnp.float32)  # (TB, 128) f32
    h = jnp.maximum(h + b3_ref[...], 0.0).astype(jnp.bfloat16)

    out = jnp.dot(h, w4_ref[...], preferred_element_type=jnp.float32)  # (TB, 128) f32
    o_ref[...] = (out + b4_ref[...]).astype(o_ref.dtype)


def _pad2(a, rows, cols):
    r, c = a.shape
    return jnp.pad(a, ((0, rows - r), (0, cols - c)))


def prepare_params(params):
    """Pad to lane-dense shapes and cast weights to bf16 (biases stay fp32)."""
    return {
        "w1": _pad2(params["w1"], D_IN_P, D_H1).astype(jnp.bfloat16),    # (896, 256)
        "b1": params["b1"].astype(jnp.float32),                          # (1, 256)
        "w2": params["w2"].astype(jnp.bfloat16),                         # (256, 128)
        "b2": params["b2"].astype(jnp.float32),                          # (1, 128)
        "w3": _pad2(params["w3"], D_H2, D_H3_P).astype(jnp.bfloat16),    # (128, 128)
        "b3": _pad2(params["b3"], 1, D_H3_P).astype(jnp.float32),        # (1, 128)
        "w4": _pad2(params["w4"], D_H3_P, D_OUT_P).astype(jnp.bfloat16), # (128, 128)
        "b4": _pad2(params["b4"], 1, D_OUT_P).astype(jnp.float32),       # (1, 128)
    }


@functools.partial(jax.jit, static_argnames=("tb",))
def _forward_impl(x_nchw, pp, tb):
    B = x_nchw.shape[0]
    # nn.Flatten: flatten all dims after batch, row-major (same as torch).
    x = x_nchw.reshape(B, -1).astype(jnp.float32)                     # (B, 784)

    # Pad batch to a multiple of the tile and the feature dim to 7*128.
    b_pad = pl.cdiv(B, tb) * tb
    x = jnp.pad(x, ((0, b_pad - B), (0, D_IN_P - D_IN))).astype(jnp.bfloat16)

    n_tiles = b_pad // tb
    const_spec = lambda shape: pl.BlockSpec(shape, lambda i: (0, 0))

    out = pl.pallas_call(
        _mlp_kernel,
        out_shape=jax.ShapeDtypeStruct((b_pad, D_OUT_P), jnp.float32),
        grid_spec=pltpu.PrefetchScalarGridSpec(
            num_scalar_prefetch=0,
            grid=(n_tiles,),
            in_specs=[
                pl.BlockSpec((tb, D_IN_P), lambda i: (i, 0)),   # x tile (pipelined)
                const_spec((D_IN_P, D_H1)),    const_spec((1, D_H1)),    # w1, b1
                const_spec((D_H1, D_H2)),      const_spec((1, D_H2)),    # w2, b2
                const_spec((D_H2, D_H3_P)),    const_spec((1, D_H3_P)),  # w3, b3
                const_spec((D_H3_P, D_OUT_P)), const_spec((1, D_OUT_P)), # w4, b4
            ],
            out_specs=pl.BlockSpec((tb, D_OUT_P), lambda i: (i, 0)),
        ),
        compiler_params=pltpu.CompilerParams(
            dimension_semantics=("parallel",),   # shards batch tiles across TCs
        ),
    )(x, pp["w1"], pp["b1"], pp["w2"], pp["b2"],
      pp["w3"], pp["b3"], pp["w4"], pp["b4"])

    return out[:B, :D_OUT]


def neural_net_forward(x_nchw, pp, tb=None):
    """x_nchw: (B, 1, 28, 28) float32. pp: padded/bf16 params from
    prepare_params(). Returns fp32 logits of shape (B, 10)."""
    B = x_nchw.shape[0]
    if tb is None:
        # Round small batches up to one 128-row tile; cap at DEFAULT_TB.
        tb = min(DEFAULT_TB, max(128, ((B + 127) // 128) * 128))
    return _forward_impl(x_nchw, pp, tb)


def init_params(key):
    """Deterministic init mimicking PyTorch's default Linear init
    (uniform in [-1/sqrt(fan_in), 1/sqrt(fan_in)]). Weights are stored
    transposed as (in, out); biases as (1, out)."""
    dims = [(D_IN, D_H1), (D_H1, D_H2), (D_H2, D_H3), (D_H3, D_OUT)]
    params = {}
    for i, (fan_in, fan_out) in enumerate(dims, start=1):
        key, kw, kb = jax.random.split(key, 3)
        bound = 1.0 / (fan_in ** 0.5)
        params[f"w{i}"] = jax.random.uniform(
            kw, (fan_in, fan_out), jnp.float32, minval=-bound, maxval=bound)
        params[f"b{i}"] = jax.random.uniform(
            kb, (1, fan_out), jnp.float32, minval=-bound, maxval=bound)
    return params


def _reference_forward_fp32(x_nchw, params):
    """Pure-JAX fp32 reference (exact PyTorch semantics)."""
    x = x_nchw.reshape(x_nchw.shape[0], -1).astype(jnp.float32)
    h = jnp.maximum(x @ params["w1"] + params["b1"], 0.0)
    h = jnp.maximum(h @ params["w2"] + params["b2"], 0.0)
    h = jnp.maximum(h @ params["w3"] + params["b3"], 0.0)
    return h @ params["w4"] + params["b4"]


def _reference_forward_bf16(x_nchw, pp):
    """Pure-JAX reference using the same padded bf16 params / fp32 accumulation
    as the kernel (tight numerical comparison)."""
    B = x_nchw.shape[0]
    x = x_nchw.reshape(B, -1).astype(jnp.float32)
    x = jnp.pad(x, ((0, 0), (0, D_IN_P - D_IN))).astype(jnp.bfloat16)
    h = jnp.dot(x, pp["w1"], preferred_element_type=jnp.float32) + pp["b1"]
    h = jnp.maximum(h, 0.0).astype(jnp.bfloat16)
    h = jnp.dot(h, pp["w2"], preferred_element_type=jnp.float32) + pp["b2"]
    h = jnp.maximum(h, 0.0).astype(jnp.bfloat16)
    h = jnp.dot(h, pp["w3"], preferred_element_type=jnp.float32) + pp["b3"]
    h = jnp.maximum(h, 0.0).astype(jnp.bfloat16)
    out = jnp.dot(h, pp["w4"], preferred_element_type=jnp.float32) + pp["b4"]
    return out[:, :D_OUT]


if __name__ == "__main__":
    key = jax.random.PRNGKey(0)
    key, kx1, kx2 = jax.random.split(key, 3)

    params = init_params(key)
    pp = prepare_params(params)

    # --- small sanity batch (single 128-row tile) ---
    B = 8
    x = jax.random.normal(kx1, (B, 1, 28, 28), dtype=jnp.float32)

    logits = jax.block_until_ready(neural_net_forward(x, pp))
    assert logits.shape == (B, D_OUT)

    ref_bf16 = _reference_forward_bf16(x, pp)
    ref_fp32 = _reference_forward_fp32(x, params)
    assert jnp.allclose(logits, ref_bf16, atol=1e-2, rtol=1e-2), \
        "mismatch vs bf16 reference"
    assert jnp.allclose(logits, ref_fp32, atol=5e-2, rtol=5e-2), \
        "mismatch vs fp32 reference"

    # --- multi-tile grid (B not a multiple of TB -> batch padding path) ---
    B2 = 1300
    x2 = jax.random.normal(kx2, (B2, 1, 28, 28), dtype=jnp.float32)
    logits2 = jax.block_until_ready(neural_net_forward(x2, pp))
    assert logits2.shape == (B2, D_OUT)
    ref2 = _reference_forward_bf16(x2, pp)
    assert jnp.allclose(logits2, ref2, atol=1e-2, rtol=1e-2), \
        "mismatch vs bf16 reference (multi-tile)"

    print("KERNEL_OK")
</pallas_src>

<mosaic_0001>
module attributes {stable_mosaic.version = 11 : i64} {
  func.func @_mlp_kernel(%arg0: i32, %arg1: memref<128x896xbf16, #tpu.memory_space<vmem>>, %arg2: memref<896x256xbf16, #tpu.memory_space<vmem>>, %arg3: memref<1x256xf32, #tpu.memory_space<vmem>>, %arg4: memref<256x128xbf16, #tpu.memory_space<vmem>>, %arg5: memref<1x128xf32, #tpu.memory_space<vmem>>, %arg6: memref<128x128xbf16, #tpu.memory_space<vmem>>, %arg7: memref<1x128xf32, #tpu.memory_space<vmem>>, %arg8: memref<128x128xbf16, #tpu.memory_space<vmem>>, %arg9: memref<1x128xf32, #tpu.memory_space<vmem>>, %arg10: memref<128x128xf32, #tpu.memory_space<vmem>>) attributes {dimension_semantics = [#tpu.dimension_semantics<parallel>], iteration_bounds = array<i64: 1>, scalar_prefetch = 0 : i64, scratch_operands = 0 : i64, tpu.core_type = #tpu.core_type<tc>, window_params = [{transform_indices = @transform_0, window_bounds = array<i64: 128, 896>}, {pipeline_mode = #tpu.pipeline_mode<synchronous>, transform_indices = @transform_1, window_bounds = array<i64: 896, 256>}, {pipeline_mode = #tpu.pipeline_mode<synchronous>, transform_indices = @transform_2, window_bounds = array<i64: 1, 256>}, {pipeline_mode = #tpu.pipeline_mode<synchronous>, transform_indices = @transform_3, window_bounds = array<i64: 256, 128>}, {pipeline_mode = #tpu.pipeline_mode<synchronous>, transform_indices = @transform_4, window_bounds = array<i64: 1, 128>}, {pipeline_mode = #tpu.pipeline_mode<synchronous>, transform_indices = @transform_5, window_bounds = array<i64: 128, 128>}, {pipeline_mode = #tpu.pipeline_mode<synchronous>, transform_indices = @transform_6, window_bounds = array<i64: 1, 128>}, {pipeline_mode = #tpu.pipeline_mode<synchronous>, transform_indices = @transform_7, window_bounds = array<i64: 128, 128>}, {pipeline_mode = #tpu.pipeline_mode<synchronous>, transform_indices = @transform_8, window_bounds = array<i64: 1, 128>}, {transform_indices = @transform_9, window_bounds = array<i64: 128, 128>}]} {
    %c0 = arith.constant 0 : index
    %c0_0 = arith.constant 0 : index
    %0 = vector.load %arg1[%c0, %c0_0] : memref<128x896xbf16, #tpu.memory_space<vmem>>, vector<128x896xbf16>
    %c0_1 = arith.constant 0 : index
    %c0_2 = arith.constant 0 : index
    %1 = vector.load %arg2[%c0_1, %c0_2] : memref<896x256xbf16, #tpu.memory_space<vmem>>, vector<896x256xbf16>
    %cst = arith.constant dense<0.000000e+00> : vector<128x256xf32>
    %2 = tpu.matmul %0, %1, %cst {dimension_numbers = #tpu.dot_dimension_numbers<[1], [0], [0], [1], [0, 0, 1, 1], [], []>} : vector<128x896xbf16>, vector<896x256xbf16>, vector<128x256xf32> -> vector<128x256xf32>
    %c0_3 = arith.constant 0 : index
    %c0_4 = arith.constant 0 : index
    %3 = vector.load %arg3[%c0_3, %c0_4] : memref<1x256xf32, #tpu.memory_space<vmem>>, vector<1x256xf32>
    %4 = vector.broadcast %3 : vector<1x256xf32> to vector<128x256xf32>
    %5 = arith.addf %2, %4 : vector<128x256xf32>
    %cst_5 = arith.constant 0.000000e+00 : f32
    %6 = vector.broadcast %cst_5 : f32 to vector<128x256xf32>
    %7 = arith.maximumf %5, %6 : vector<128x256xf32>
    %8 = arith.truncf %7 : vector<128x256xf32> to vector<128x256xbf16>
    %c0_6 = arith.constant 0 : index
    %c0_7 = arith.constant 0 : index
    %9 = vector.load %arg4[%c0_6, %c0_7] : memref<256x128xbf16, #tpu.memory_space<vmem>>, vector<256x128xbf16>
    %cst_8 = arith.constant dense<0.000000e+00> : vector<128x128xf32>
    %10 = tpu.matmul %8, %9, %cst_8 {dimension_numbers = #tpu.dot_dimension_numbers<[1], [0], [0], [1], [0, 0, 1, 1], [], []>} : vector<128x256xbf16>, vector<256x128xbf16>, vector<128x128xf32> -> vector<128x128xf32>
    %c0_9 = arith.constant 0 : index
    %c0_10 = arith.constant 0 : index
    %11 = vector.load %arg5[%c0_9, %c0_10] : memref<1x128xf32, #tpu.memory_space<vmem>>, vector<1x128xf32>
    %12 = vector.broadcast %11 : vector<1x128xf32> to vector<128x128xf32>
    %13 = arith.addf %10, %12 : vector<128x128xf32>
    %cst_11 = arith.constant 0.000000e+00 : f32
    %14 = vector.broadcast %cst_11 : f32 to vector<128x128xf32>
    %15 = arith.maximumf %13, %14 : vector<128x128xf32>
    %16 = arith.truncf %15 : vector<128x128xf32> to vector<128x128xbf16>
    %c0_12 = arith.constant 0 : index
    %c0_13 = arith.constant 0 : index
    %17 = vector.load %arg6[%c0_12, %c0_13] : memref<128x128xbf16, #tpu.memory_space<vmem>>, vector<128x128xbf16>
    %cst_14 = arith.constant dense<0.000000e+00> : vector<128x128xf32>
    %18 = tpu.matmul %16, %17, %cst_14 {dimension_numbers = #tpu.dot_dimension_numbers<[1], [0], [0], [1], [0, 0, 1, 1], [], []>} : vector<128x128xbf16>, vector<128x128xbf16>, vector<128x128xf32> -> vector<128x128xf32>
    %c0_15 = arith.constant 0 : index
    %c0_16 = arith.constant 0 : index
    %19 = vector.load %arg7[%c0_15, %c0_16] : memref<1x128xf32, #tpu.memory_space<vmem>>, vector<1x128xf32>
    %20 = vector.broadcast %19 : vector<1x128xf32> to vector<128x128xf32>
    %21 = arith.addf %18, %20 : vector<128x128xf32>
    %cst_17 = arith.constant 0.000000e+00 : f32
    %22 = vector.broadcast %cst_17 : f32 to vector<128x128xf32>
    %23 = arith.maximumf %21, %22 : vector<128x128xf32>
    %24 = arith.truncf %23 : vector<128x128xf32> to vector<128x128xbf16>
    %c0_18 = arith.constant 0 : index
    %c0_19 = arith.constant 0 : index
    %25 = vector.load %arg8[%c0_18, %c0_19] : memref<128x128xbf16, #tpu.memory_space<vmem>>, vector<128x128xbf16>
    %cst_20 = arith.constant dense<0.000000e+00> : vector<128x128xf32>
    %26 = tpu.matmul %24, %25, %cst_20 {dimension_numbers = #tpu.dot_dimension_numbers<[1], [0], [0], [1], [0, 0, 1, 1], [], []>} : vector<128x128xbf16>, vector<128x128xbf16>, vector<128x128xf32> -> vector<128x128xf32>
    %c0_21 = arith.constant 0 : index
    %c0_22 = arith.constant 0 : index
    %27 = vector.load %arg9[%c0_21, %c0_22] : memref<1x128xf32, #tpu.memory_space<vmem>>, vector<1x128xf32>
    %28 = vector.broadcast %27 : vector<1x128xf32> to vector<128x128xf32>
    %29 = arith.addf %26, %28 : vector<128x128xf32>
    %c0_23 = arith.constant 0 : index
    %c0_24 = arith.constant 0 : index
    %30 = vector.load %arg10[%c0_23, %c0_24] : memref<128x128xf32, #tpu.memory_space<vmem>>, vector<128x128xf32>
    tpu.vector_store %arg10[%c0_23, %c0_24], %29 {strides = array<i32>} : memref<128x128xf32, #tpu.memory_space<vmem>>, vector<128x128xf32>,
    return
  }
  func.func @transform_0(%arg0: i32) -> (i32, i32) {
    %c0_i32 = arith.constant 0 : i32
    %c0_i32_0 = arith.constant 0 : i32
    return %arg0, %c0_i32 : i32, i32
  }
  func.func @transform_1(%arg0: i32) -> (i32, i32) {
    %c0_i32 = arith.constant 0 : i32
    %c0_i32_0 = arith.constant 0 : i32
    %c0_i32_1 = arith.constant 0 : i32
    return %c0_i32, %c0_i32_0 : i32, i32
  }
  func.func @transform_2(%arg0: i32) -> (i32, i32) {
    %c0_i32 = arith.constant 0 : i32
    %c0_i32_0 = arith.constant 0 : i32
    %c0_i32_1 = arith.constant 0 : i32
    return %c0_i32, %c0_i32_0 : i32, i32
  }
  func.func @transform_3(%arg0: i32) -> (i32, i32) {
    %c0_i32 = arith.constant 0 : i32
    %c0_i32_0 = arith.constant 0 : i32
    %c0_i32_1 = arith.constant 0 : i32
    return %c0_i32, %c0_i32_0 : i32, i32
  }
  func.func @transform_4(%arg0: i32) -> (i32, i32) {
    %c0_i32 = arith.constant 0 : i32
    %c0_i32_0 = arith.constant 0 : i32
    %c0_i32_1 = arith.constant 0 : i32
    return %c0_i32, %c0_i32_0 : i32, i32
  }
  func.func @transform_5(%arg0: i32) -> (i32, i32) {
    %c0_i32 = arith.constant 0 : i32
    %c0_i32_0 = arith.constant 0 : i32
    %c0_i32_1 = arith.constant 0 : i32
    return %c0_i32, %c0_i32_0 : i32, i32
  }
  func.func @transform_6(%arg0: i32) -> (i32, i32) {
    %c0_i32 = arith.constant 0 : i32
    %c0_i32_0 = arith.constant 0 : i32
    %c0_i32_1 = arith.constant 0 : i32
    return %c0_i32, %c0_i32_0 : i32, i32
  }
  func.func @transform_7(%arg0: i32) -> (i32, i32) {
    %c0_i32 = arith.constant 0 : i32
    %c0_i32_0 = arith.constant 0 : i32
    %c0_i32_1 = arith.constant 0 : i32
    return %c0_i32, %c0_i32_0 : i32, i32
  }
  func.func @transform_8(%arg0: i32) -> (i32, i32) {
    %c0_i32 = arith.constant 0 : i32
    %c0_i32_0 = arith.constant 0 : i32
    %c0_i32_1 = arith.constant 0 : i32
    return %c0_i32, %c0_i32_0 : i32, i32
  }
  func.func @transform_9(%arg0: i32) -> (i32, i32) {
    %c0_i32 = arith.constant 0 : i32
    %c0_i32_0 = arith.constant 0 : i32
    return %arg0, %c0_i32 : i32, i32
  }
}

</mosaic_0001>

<llo_original>
// kernel: _forward_impl.1
$region0: #{_forward_impl.1}
  #allocation0 [shape = 'u32[]', space=smem, size = 0x4, offset = 0x4, fixed_abs, tag = 'smem constant byte address 0x4 - core index']
  #allocation1 [shape = 'u32[72,128]{1,0:T(1,128)}', space=vmem, size = 0x9000, scoped, tag = 'internal scratch']
  %s0 = inlined_call_operand.vmem [shape: bf16[128,896], index: 0, kind: input, shape index: {}]
  %s1 = inlined_call_operand.vmem [shape: bf16[896,256], index: 1, kind: input, shape index: {}]
  %s2 = inlined_call_operand.vmem [shape: f32[1,256], index: 2, kind: input, shape index: {}]
  %s3 = inlined_call_operand.hbm [shape: bf16[256,128], index: 3, kind: input, shape index: {}]
  %s4 = inlined_call_operand.vmem [shape: f32[1,128], index: 4, kind: input, shape index: {}]
  %s5 = inlined_call_operand.vmem [shape: bf16[128,128], index: 5, kind: input, shape index: {}]
  %s6 = inlined_call_operand.vmem [shape: f32[1,128], index: 6, kind: input, shape index: {}]
  %s7 = inlined_call_operand.hbm [shape: bf16[128,128], index: 7, kind: input, shape index: {}]
  %s8 = inlined_call_operand.vmem [shape: f32[1,128], index: 8, kind: input, shape index: {}]
  %s9 = inlined_call_operand.vmem [shape: f32[128,128], index: 9, kind: output, shape index: {}]
  %s10 = sld [smem:[#allocation0]]
  $region54: #{_forward_impl.1} parent=0
    _
  %s12 = ssub.s32 1, %s10
  %s13 = scalar_select 0, %s12, %s10
  $region1: #{_forward_impl.1} parent=0
    #allocation2 [shape = 'u8[65536]{0}', space=vmem, size = 0x10000, scoped, tag = 'input window, operand 3, single buffered']
    #allocation3 [shape = 's32[1]{0}', space=sflag, size = 0x4, scoped, tag = 'scoped memory for _forward_impl.1']
    #allocation4 [shape = 'u8[32768]{0}', space=vmem, size = 0x8000, scoped, tag = 'input window, operand 7, single buffered']
    #allocation5 [shape = 's32[1]{0}', space=sflag, size = 0x4, scoped, tag = 'scoped memory for _forward_impl.1']
    %14 = vsyncpa [#allocation3], 0
    %15 = vsyncpa [#allocation5], 0
    // Predicated region
    $region2: #{_forward_impl.1} parent=1 // pred_check
      _
    $region3: #{_forward_impl.1} parent=1 // pred_check_branch
      %17 = sbr.rel (0) target = $region5
    $region4: #{_forward_impl.1} parent=1 // pred_region
      _
    $region5: #{_forward_impl.1} parent=1 // pred_fallthru
      _
    // Predicated region
    $region6: #{_forward_impl.1} parent=1 // pred_check
      _
    $region7: #{_forward_impl.1} parent=1 // pred_check_branch
      %19 = sbr.rel (0) target = $region9
    $region8: #{_forward_impl.1} parent=1 // pred_region
      _
    $region9: #{_forward_impl.1} parent=1 // pred_fallthru
      _
    // Predicated region
    $region10: #{_forward_impl.1} parent=1 // pred_check
      _
    $region11: #{_forward_impl.1} parent=1 // pred_check_branch
      %21 = sbr.rel (0) target = $region13
    $region12: #{_forward_impl.1} parent=1 // pred_region
      _
    $region13: #{_forward_impl.1} parent=1 // pred_fallthru
      _
    // Predicated region
    $region14: #{_forward_impl.1} parent=1 // pred_check
      _
    $region15: #{_forward_impl.1} parent=1 // pred_check_branch
      %23 = sbr.rel (0) target = $region17
    $region16: #{_forward_impl.1} parent=1 // pred_region
      %25 = vsyncadd [#allocation3], 0
      %s26 = sshll.u32 %s3, 4
      %s27 = int_to_ptr.hbm [resolvable:$true] %s26
      %s28 = sshll.u32 [#allocation2], 4
      %s29 = int_to_ptr.vmem [resolvable:$true] %s28
      %34 = dma.hbm_to_vmem [thread:$0]  %s27, 2048, %s29, [#allocation3], 64, 64, 4
    $region17: #{_forward_impl.1} parent=1 // pred_fallthru
      _
    // Predicated region
    $region18: #{_forward_impl.1} parent=1 // pred_check
      _
    $region19: #{_forward_impl.1} parent=1 // pred_check_branch
      %36 = sbr.rel (0) target = $region21
    $region20: #{_forward_impl.1} parent=1 // pred_region
      _
    $region21: #{_forward_impl.1} parent=1 // pred_fallthru
      _
    // Predicated region
    $region22: #{_forward_impl.1} parent=1 // pred_check
      _
    $region23: #{_forward_impl.1} parent=1 // pred_check_branch
      %38 = sbr.rel (0) target = $region25
    $region24: #{_forward_impl.1} parent=1 // pred_region
      _
    $region25: #{_forward_impl.1} parent=1 // pred_fallthru
      _
    // Predicated region
    $region26: #{_forward_impl.1} parent=1 // pred_check
      _
    $region27: #{_forward_impl.1} parent=1 // pred_check_branch
      %40 = sbr.rel (0) target = $region29
    $region28: #{_forward_impl.1} parent=1 // pred_region
      _
    $region29: #{_forward_impl.1} parent=1 // pred_fallthru
      _
    // Predicated region
    $region30: #{_forward_impl.1} parent=1 // pred_check
      _
    $region31: #{_forward_impl.1} parent=1 // pred_check_branch
      %42 = sbr.rel (0) target = $region33
    $region32: #{_forward_impl.1} parent=1 // pred_region
      %44 = vsyncadd [#allocation5], 0
      %s45 = sshll.u32 %s7, 4
      %s46 = int_to_ptr.hbm [resolvable:$true] %s45
      %s47 = sshll.u32 [#allocation4], 4
      %s48 = int_to_ptr.vmem [resolvable:$true] %s47
      %53 = dma.hbm_to_vmem [thread:$0]  %s46, 1024, %s48, [#allocation5], 64, 64, 4
    $region33: #{_forward_impl.1} parent=1 // pred_fallthru
      _
    // Predicated region
    $region34: #{_forward_impl.1} parent=1 // pred_check
      _
    $region35: #{_forward_impl.1} parent=1 // pred_check_branch
      %55 = sbr.rel (0) target = $region37
    $region36: #{_forward_impl.1} parent=1 // pred_region
      _
    $region37: #{_forward_impl.1} parent=1 // pred_fallthru
      _
    // Predicated region
    $region38: #{_forward_impl.1} parent=1 // pred_check
      _
    $region39: #{_forward_impl.1} parent=1 // pred_check_branch
      %57 = sbr.rel (0) target = $region41
    $region40: #{_forward_impl.1} parent=1 // pred_region
      %59 = dma.done [#allocation3], 2048
    $region41: #{_forward_impl.1} parent=1 // pred_fallthru
      _
    // Predicated region
    $region42: #{_forward_impl.1} parent=1 // pred_check
      _
    $region43: #{_forward_impl.1} parent=1 // pred_check_branch
      %61 = sbr.rel (0) target = $region45
    $region44: #{_forward_impl.1} parent=1 // pred_region
      %63 = dma.done [#allocation5], 1024
    $region45: #{_forward_impl.1} parent=1 // pred_fallthru
      _
    %v64 = vld [vmem:[%s0] sm:$0xff]
    %v65 = vld [vmem:[%s0 + $0x8] sm:$0xff]
    %v66 = vld [vmem:[%s0 + $0x10] sm:$0xff]
    %v67 = vld [vmem:[%s0 + $0x18] sm:$0xf]
    %v68 = vld [vmem:[%s0 + $0x1c] sm:$0xff]
    %v69 = vld [vmem:[%s0 + $0x24] sm:$0xff]
    %v70 = vld [vmem:[%s0 + $0x2c] sm:$0xff]
    %v71 = vld [vmem:[%s0 + $0x34] sm:$0xf]
    %v72 = vld [vmem:[%s0 + $0x38] sm:$0xff]
    %v73 = vld [vmem:[%s0 + $0x40] sm:$0xff]
    %v74 = vld [vmem:[%s0 + $0x48] sm:$0xff]
    %v75 = vld [vmem:[%s0 + $0x50] sm:$0xf]
    %v76 = vld [vmem:[%s0 + $0x54] sm:$0xff]
    %v77 = vld [vmem:[%s0 + $0x5c] sm:$0xff]
    %v78 = vld [vmem:[%s0 + $0x64] sm:$0xff]
    %v79 = vld [vmem:[%s0 + $0x6c] sm:$0xf]
    %v80 = vld [vmem:[%s0 + $0x70] sm:$0xff]
    %v81 = vld [vmem:[%s0 + $0x78] sm:$0xff]
    %v82 = vld [vmem:[%s0 + $0x80] sm:$0xff]
    %v83 = vld [vmem:[%s0 + $0x88] sm:$0xf]
    %v84 = vld [vmem:[%s0 + $0x8c] sm:$0xff]
    %v85 = vld [vmem:[%s0 + $0x94] sm:$0xff]
    %v86 = vld [vmem:[%s0 + $0x9c] sm:$0xff]
    %v87 = vld [vmem:[%s0 + $0xa4] sm:$0xf]
    %v88 = vld [vmem:[%s0 + $0xa8] sm:$0xff]
    %v89 = vld [vmem:[%s0 + $0xb0] sm:$0xff]
    %v90 = vld [vmem:[%s0 + $0xb8] sm:$0xff]
    %v91 = vld [vmem:[%s0 + $0xc0] sm:$0xf]
    %v92 = vld [vmem:[%s0 + $0xc4] sm:$0xff]
    %v93 = vld [vmem:[%s0 + $0xcc] sm:$0xff]
    %v94 = vld [vmem:[%s0 + $0xd4] sm:$0xff]
    %v95 = vld [vmem:[%s0 + $0xdc] sm:$0xf]
    %v96 = vld [vmem:[%s0 + $0xe0] sm:$0xff]
    %v97 = vld [vmem:[%s0 + $0xe8] sm:$0xff]
    %v98 = vld [vmem:[%s0 + $0xf0] sm:$0xff]
    %v99 = vld [vmem:[%s0 + $0xf8] sm:$0xf]
    %v100 = vld [vmem:[%s0 + $0xfc] sm:$0xff]
    %v101 = vld [vmem:[%s0 + $0x104] sm:$0xff]
    %v102 = vld [vmem:[%s0 + $0x10c] sm:$0xff]
    %v103 = vld [vmem:[%s0 + $0x114] sm:$0xf]
    %v104 = vld [vmem:[%s0 + $0x118] sm:$0xff]
    %v105 = vld [vmem:[%s0 + $0x120] sm:$0xff]
    %v106 = vld [vmem:[%s0 + $0x128] sm:$0xff]
    %v107 = vld [vmem:[%s0 + $0x130] sm:$0xf]
    %v108 = vld [vmem:[%s0 + $0x134] sm:$0xff]
    %v109 = vld [vmem:[%s0 + $0x13c] sm:$0xff]
    %v110 = vld [vmem:[%s0 + $0x144] sm:$0xff]
    %v111 = vld [vmem:[%s0 + $0x14c] sm:$0xf]
    %v112 = vld [vmem:[%s0 + $0x150] sm:$0xff]
    %v113 = vld [vmem:[%s0 + $0x158] sm:$0xff]
    %v114 = vld [vmem:[%s0 + $0x160] sm:$0xff]
    %v115 = vld [vmem:[%s0 + $0x168] sm:$0xf]
    %v116 = vld [vmem:[%s0 + $0x16c] sm:$0xff]
    %v117 = vld [vmem:[%s0 + $0x174] sm:$0xff]
    %v118 = vld [vmem:[%s0 + $0x17c] sm:$0xff]
    %v119 = vld [vmem:[%s0 + $0x184] sm:$0xf]
    %v120 = vld [vmem:[%s0 + $0x188] sm:$0xff]
    %v121 = vld [vmem:[%s0 + $0x190] sm:$0xff]
    %v122 = vld [vmem:[%s0 + $0x198] sm:$0xff]
    %v123 = vld [vmem:[%s0 + $0x1a0] sm:$0xf]
    %v124 = vld [vmem:[%s0 + $0x1a4] sm:$0xff]
    %v125 = vld [vmem:[%s0 + $0x1ac] sm:$0xff]
    %v126 = vld [vmem:[%s0 + $0x1b4] sm:$0xff]
    %v127 = vld [vmem:[%s0 + $0x1bc] sm:$0xf]
    %v128 = vld [vmem:[%s1] sm:$0xff]
    %v129 = vld [vmem:[%s1 + $0x8] sm:$0xff]
    %v130 = vld [vmem:[%s1 + $0x10] sm:$0xff]
    %v131 = vld [vmem:[%s1 + $0x18] sm:$0xff]
    %v132 = vld [vmem:[%s1 + $0x20] sm:$0xff]
    %v133 = vld [vmem:[%s1 + $0x28] sm:$0xff]
    %v134 = vld [vmem:[%s1 + $0x30] sm:$0xff]
    %v135 = vld [vmem:[%s1 + $0x38] sm:$0xff]
    %v136 = vld [vmem:[%s1 + $0x40] sm:$0xff]
    %v137 = vld [vmem:[%s1 + $0x48] sm:$0xff]
    %v138 = vld [vmem:[%s1 + $0x50] sm:$0xff]
    %v139 = vld [vmem:[%s1 + $0x58] sm:$0xff]
    %v140 = vld [vmem:[%s1 + $0x60] sm:$0xff]
    %v141 = vld [vmem:[%s1 + $0x68] sm:$0xff]
    %v142 = vld [vmem:[%s1 + $0x70] sm:$0xff]
    %v143 = vld [vmem:[%s1 + $0x78] sm:$0xff]
    %v144 = vld [vmem:[%s1 + $0x80] sm:$0xff]
    %v145 = vld [vmem:[%s1 + $0x88] sm:$0xff]
    %v146 = vld [vmem:[%s1 + $0x90] sm:$0xff]
    %v147 = vld [vmem:[%s1 + $0x98] sm:$0xff]
    %v148 = vld [vmem:[%s1 + $0xa0] sm:$0xff]
    %v149 = vld [vmem:[%s1 + $0xa8] sm:$0xff]
    %v150 = vld [vmem:[%s1 + $0xb0] sm:$0xff]
    %v151 = vld [vmem:[%s1 + $0xb8] sm:$0xff]
    %v152 = vld [vmem:[%s1 + $0xc0] sm:$0xff]
    %v153 = vld [vmem:[%s1 + $0xc8] sm:$0xff]
    %v154 = vld [vmem:[%s1 + $0xd0] sm:$0xff]
    %v155 = vld [vmem:[%s1 + $0xd8] sm:$0xff]
    %v156 = vld [vmem:[%s1 + $0xe0] sm:$0xff]
    %v157 = vld [vmem:[%s1 + $0xe8] sm:$0xff]
    %v158 = vld [vmem:[%s1 + $0xf0] sm:$0xff]
    %v159 = vld [vmem:[%s1 + $0xf8] sm:$0xff]
    %v160 = vld [vmem:[%s1 + $0x100] sm:$0xff]
    %v161 = vld [vmem:[%s1 + $0x108] sm:$0xff]
    %v162 = vld [vmem:[%s1 + $0x110] sm:$0xff]
    %v163 = vld [vmem:[%s1 + $0x118] sm:$0xff]
    %v164 = vld [vmem:[%s1 + $0x120] sm:$0xff]
    %v165 = vld [vmem:[%s1 + $0x128] sm:$0xff]
    %v166 = vld [vmem:[%s1 + $0x130] sm:$0xff]
    %v167 = vld [vmem:[%s1 + $0x138] sm:$0xff]
    %v168 = vld [vmem:[%s1 + $0x140] sm:$0xff]
    %v169 = vld [vmem:[%s1 + $0x148] sm:$0xff]
    %v170 = vld [vmem:[%s1 + $0x150] sm:$0xff]
    %v171 = vld [vmem:[%s1 + $0x158] sm:$0xff]
    %v172 = vld [vmem:[%s1 + $0x160] sm:$0xff]
    %v173 = vld [vmem:[%s1 + $0x168] sm:$0xff]
    %v174 = vld [vmem:[%s1 + $0x170] sm:$0xff]
    %v175 = vld [vmem:[%s1 + $0x178] sm:$0xff]
    %v176 = vld [vmem:[%s1 + $0x180] sm:$0xff]
    %v177 = vld [vmem:[%s1 + $0x188] sm:$0xff]
    %v178 = vld [vmem:[%s1 + $0x190] sm:$0xff]
    %v179 = vld [vmem:[%s1 + $0x198] sm:$0xff]
    %v180 = vld [vmem:[%s1 + $0x1a0] sm:$0xff]
    %v181 = vld [vmem:[%s1 + $0x1a8] sm:$0xff]
    %v182 = vld [vmem:[%s1 + $0x1b0] sm:$0xff]
    %v183 = vld [vmem:[%s1 + $0x1b8] sm:$0xff]
    %v184 = vld [vmem:[%s1 + $0x1c0] sm:$0xff]
    %v185 = vld [vmem:[%s1 + $0x1c8] sm:$0xff]
    %v186 = vld [vmem:[%s1 + $0x1d0] sm:$0xff]
    %v187 = vld [vmem:[%s1 + $0x1d8] sm:$0xff]
    %v188 = vld [vmem:[%s1 + $0x1e0] sm:$0xff]
    %v189 = vld [vmem:[%s1 + $0x1e8] sm:$0xff]
    %v190 = vld [vmem:[%s1 + $0x1f0] sm:$0xff]
    %v191 = vld [vmem:[%s1 + $0x1f8] sm:$0xff]
    %v192 = vld [vmem:[%s1 + $0x200] sm:$0xff]
    %v193 = vld [vmem:[%s1 + $0x208] sm:$0xff]
    %v194 = vld [vmem:[%s1 + $0x210] sm:$0xff]
    %v195 = vld [vmem:[%s1 + $0x218] sm:$0xff]
    %v196 = vld [vmem:[%s1 + $0x220] sm:$0xff]
    %v197 = vld [vmem:[%s1 + $0x228] sm:$0xff]
    %v198 = vld [vmem:[%s1 + $0x230] sm:$0xff]
    %v199 = vld [vmem:[%s1 + $0x238] sm:$0xff]
    %v200 = vld [vmem:[%s1 + $0x240] sm:$0xff]
    %v201 = vld [vmem:[%s1 + $0x248] sm:$0xff]
    %v202 = vld [vmem:[%s1 + $0x250] sm:$0xff]
    %v203 = vld [vmem:[%s1 + $0x258] sm:$0xff]
    %v204 = vld [vmem:[%s1 + $0x260] sm:$0xff]
    %v205 = vld [vmem:[%s1 + $0x268] sm:$0xff]
    %v206 = vld [vmem:[%s1 + $0x270] sm:$0xff]
    %v207 = vld [vmem:[%s1 + $0x278] sm:$0xff]
    %v208 = vld [vmem:[%s1 + $0x280] sm:$0xff]
    %v209 = vld [vmem:[%s1 + $0x288] sm:$0xff]
    %v210 = vld [vmem:[%s1 + $0x290] sm:$0xff]
    %v211 = vld [vmem:[%s1 + $0x298] sm:$0xff]
    %v212 = vld [vmem:[%s1 + $0x2a0] sm:$0xff]
    %v213 = vld [vmem:[%s1 + $0x2a8] sm:$0xff]
    %v214 = vld [vmem:[%s1 + $0x2b0] sm:$0xff]
    %v215 = vld [vmem:[%s1 + $0x2b8] sm:$0xff]
    %v216 = vld [vmem:[%s1 + $0x2c0] sm:$0xff]
    %v217 = vld [vmem:[%s1 + $0x2c8] sm:$0xff]
    %v218 = vld [vmem:[%s1 + $0x2d0] sm:$0xff]
    %v219 = vld [vmem:[%s1 + $0x2d8] sm:$0xff]
    %v220 = vld [vmem:[%s1 + $0x2e0] sm:$0xff]
    %v221 = vld [vmem:[%s1 + $0x2e8] sm:$0xff]
    %v222 = vld [vmem:[%s1 + $0x2f0] sm:$0xff]
    %v223 = vld [vmem:[%s1 + $0x2f8] sm:$0xff]
    %v224 = vld [vmem:[%s1 + $0x300] sm:$0xff]
    %v225 = vld [vmem:[%s1 + $0x308] sm:$0xff]
    %v226 = vld [vmem:[%s1 + $0x310] sm:$0xff]
    %v227 = vld [vmem:[%s1 + $0x318] sm:$0xff]
    %v228 = vld [vmem:[%s1 + $0x320] sm:$0xff]
    %v229 = vld [vmem:[%s1 + $0x328] sm:$0xff]
    %v230 = vld [vmem:[%s1 + $0x330] sm:$0xff]
    %v231 = vld [vmem:[%s1 + $0x338] sm:$0xff]
    %v232 = vld [vmem:[%s1 + $0x340] sm:$0xff]
    %v233 = vld [vmem:[%s1 + $0x348] sm:$0xff]
    %v234 = vld [vmem:[%s1 + $0x350] sm:$0xff]
    %v235 = vld [vmem:[%s1 + $0x358] sm:$0xff]
    %v236 = vld [vmem:[%s1 + $0x360] sm:$0xff]
    %v237 = vld [vmem:[%s1 + $0x368] sm:$0xff]
    %v238 = vld [vmem:[%s1 + $0x370] sm:$0xff]
    %v239 = vld [vmem:[%s1 + $0x378] sm:$0xff]
    %v240 = vld [vmem:[%s2] sm:$0x3]
    %v242 = vperm.slane %v240, 0
    %v243 = vperm.slane %v240, 1
    %v310 = vunpack.c.l.b16 %v64
    %v311 = vunpack.c.h.b16 %v64
    %v312 = vunpack.c.l.b16 %v65
    %v313 = vunpack.c.h.b16 %v65
    %v314 = vunpack.c.l.b16 %v66
    %v315 = vunpack.c.h.b16 %v66
    %v316 = vunpack.c.l.b16 %v67
    %v317 = vunpack.c.l.b16 %v68
    %v318 = vunpack.c.h.b16 %v68
    %v319 = vunpack.c.l.b16 %v69
    %v320 = vunpack.c.h.b16 %v69
    %v321 = vunpack.c.l.b16 %v70
    %v322 = vunpack.c.h.b16 %v70
    %v323 = vunpack.c.l.b16 %v71
    %v324 = vunpack.c.l.b16 %v72
    %v325 = vunpack.c.h.b16 %v72
    %v326 = vunpack.c.l.b16 %v73
    %v327 = vunpack.c.h.b16 %v73
    %v328 = vunpack.c.l.b16 %v74
    %v329 = vunpack.c.h.b16 %v74
    %v330 = vunpack.c.l.b16 %v75
    %v331 = vunpack.c.l.b16 %v76
    %v332 = vunpack.c.h.b16 %v76
    %v333 = vunpack.c.l.b16 %v77
    %v334 = vunpack.c.h.b16 %v77
    %v335 = vunpack.c.l.b16 %v78
    %v336 = vunpack.c.h.b16 %v78
    %v337 = vunpack.c.l.b16 %v79
    %v338 = vunpack.c.l.b16 %v80
    %v339 = vunpack.c.h.b16 %v80
    %v340 = vunpack.c.l.b16 %v81
    %v341 = vunpack.c.h.b16 %v81
    %v342 = vunpack.c.l.b16 %v82
    %v343 = vunpack.c.h.b16 %v82
    %v344 = vunpack.c.l.b16 %v83
    %v345 = vunpack.c.l.b16 %v84
    %v346 = vunpack.c.h.b16 %v84
    %v347 = vunpack.c.l.b16 %v85
    %v348 = vunpack.c.h.b16 %v85
    %v349 = vunpack.c.l.b16 %v86
    %v350 = vunpack.c.h.b16 %v86
    %v351 = vunpack.c.l.b16 %v87
    %v352 = vunpack.c.l.b16 %v88
    %v353 = vunpack.c.h.b16 %v88
    %v354 = vunpack.c.l.b16 %v89
    %v355 = vunpack.c.h.b16 %v89
    %v356 = vunpack.c.l.b16 %v90
    %v357 = vunpack.c.h.b16 %v90
    %v358 = vunpack.c.l.b16 %v91
    %v359 = vunpack.c.l.b16 %v92
    %v360 = vunpack.c.h.b16 %v92
    %v361 = vunpack.c.l.b16 %v93
    %v362 = vunpack.c.h.b16 %v93
    %v363 = vunpack.c.l.b16 %v94
    %v364 = vunpack.c.h.b16 %v94
    %v365 = vunpack.c.l.b16 %v95
    %v366 = vunpack.c.l.b16 %v96
    %v367 = vunpack.c.h.b16 %v96
    %v368 = vunpack.c.l.b16 %v97
    %v369 = vunpack.c.h.b16 %v97
    %v370 = vunpack.c.l.b16 %v98
    %v371 = vunpack.c.h.b16 %v98
    %v372 = vunpack.c.l.b16 %v99
    %v373 = vunpack.c.l.b16 %v100
    %v374 = vunpack.c.h.b16 %v100
    %v375 = vunpack.c.l.b16 %v101
    %v376 = vunpack.c.h.b16 %v101
    %v377 = vunpack.c.l.b16 %v102
    %v378 = vunpack.c.h.b16 %v102
    %v379 = vunpack.c.l.b16 %v103
    %v380 = vunpack.c.l.b16 %v104
    %v381 = vunpack.c.h.b16 %v104
    %v382 = vunpack.c.l.b16 %v105
    %v383 = vunpack.c.h.b16 %v105
    %v384 = vunpack.c.l.b16 %v106
    %v385 = vunpack.c.h.b16 %v106
    %v386 = vunpack.c.l.b16 %v107
    %v387 = vunpack.c.l.b16 %v108
    %v388 = vunpack.c.h.b16 %v108
    %v389 = vunpack.c.l.b16 %v109
    %v390 = vunpack.c.h.b16 %v109
    %v391 = vunpack.c.l.b16 %v110
    %v392 = vunpack.c.h.b16 %v110
    %v393 = vunpack.c.l.b16 %v111
    %v394 = vunpack.c.l.b16 %v112
    %v395 = vunpack.c.h.b16 %v112
    %v396 = vunpack.c.l.b16 %v113
    %v397 = vunpack.c.h.b16 %v113
    %v398 = vunpack.c.l.b16 %v114
    %v399 = vunpack.c.h.b16 %v114
    %v400 = vunpack.c.l.b16 %v115
    %v401 = vunpack.c.l.b16 %v116
    %v402 = vunpack.c.h.b16 %v116
    %v403 = vunpack.c.l.b16 %v117
    %v404 = vunpack.c.h.b16 %v117
    %v405 = vunpack.c.l.b16 %v118
    %v406 = vunpack.c.h.b16 %v118
    %v407 = vunpack.c.l.b16 %v119
    %v408 = vunpack.c.l.b16 %v120
    %v409 = vunpack.c.h.b16 %v120
    %v410 = vunpack.c.l.b16 %v121
    %v411 = vunpack.c.h.b16 %v121
    %v412 = vunpack.c.l.b16 %v122
    %v413 = vunpack.c.h.b16 %v122
    %v414 = vunpack.c.l.b16 %v123
    %v415 = vunpack.c.l.b16 %v124
    %v416 = vunpack.c.h.b16 %v124
    %v417 = vunpack.c.l.b16 %v125
    %v418 = vunpack.c.h.b16 %v125
    %v419 = vunpack.c.l.b16 %v126
    %v420 = vunpack.c.h.b16 %v126
    %v421 = vunpack.c.l.b16 %v127
    %v422 = vpack.c.b16 %v317, %v310
    %v423 = vpack.c.b16 %v318, %v311
    %v424 = vpack.c.b16 %v319, %v312
    %v425 = vpack.c.b16 %v320, %v313
    %v426 = vpack.c.b16 %v321, %v314
    %v427 = vpack.c.b16 %v322, %v315
    %v428 = vpack.c.b16 %v323, %v316
    %v429 = vpack.c.b16 %v331, %v324
    %v430 = vpack.c.b16 %v332, %v325
    %v431 = vpack.c.b16 %v333, %v326
    %v432 = vpack.c.b16 %v334, %v327
    %v433 = vpack.c.b16 %v335, %v328
    %v434 = vpack.c.b16 %v336, %v329
    %v435 = vpack.c.b16 %v337, %v330
    %v436 = vpack.c.b16 %v345, %v338
    %v437 = vpack.c.b16 %v346, %v339
    %v438 = vpack.c.b16 %v347, %v340
    %v439 = vpack.c.b16 %v348, %v341
    %v440 = vpack.c.b16 %v349, %v342
    %v441 = vpack.c.b16 %v350, %v343
    %v442 = vpack.c.b16 %v351, %v344
    %v443 = vpack.c.b16 %v359, %v352
    %v444 = vpack.c.b16 %v360, %v353
    %v445 = vpack.c.b16 %v361, %v354
    %v446 = vpack.c.b16 %v362, %v355
    %v447 = vpack.c.b16 %v363, %v356
    %v448 = vpack.c.b16 %v364, %v357
    %v449 = vpack.c.b16 %v365, %v358
    %v450 = vpack.c.b16 %v373, %v366
    %v451 = vpack.c.b16 %v374, %v367
    %v452 = vpack.c.b16 %v375, %v368
    %v453 = vpack.c.b16 %v376, %v369
    %v454 = vpack.c.b16 %v377, %v370
    %v455 = vpack.c.b16 %v378, %v371
    %v456 = vpack.c.b16 %v379, %v372
    %v457 = vpack.c.b16 %v387, %v380
    %v458 = vpack.c.b16 %v388, %v381
    %v459 = vpack.c.b16 %v389, %v382
    %v460 = vpack.c.b16 %v390, %v383
    %v461 = vpack.c.b16 %v391, %v384
    %v462 = vpack.c.b16 %v392, %v385
    %v463 = vpack.c.b16 %v393, %v386
    %v464 = vpack.c.b16 %v401, %v394
    %v465 = vpack.c.b16 %v402, %v395
    %v466 = vpack.c.b16 %v403, %v396
    %v467 = vpack.c.b16 %v404, %v397
    %v468 = vpack.c.b16 %v405, %v398
    %v469 = vpack.c.b16 %v406, %v399
    %v470 = vpack.c.b16 %v407, %v400
    %v471 = vpack.c.b16 %v415, %v408
    %v472 = vpack.c.b16 %v416, %v409
    %v473 = vpack.c.b16 %v417, %v410
    %v474 = vpack.c.b16 %v418, %v411
    %v475 = vpack.c.b16 %v419, %v412
    %v476 = vpack.c.b16 %v420, %v413
    %v477 = vpack.c.b16 %v421, %v414
    %v646 = vunpack.c.l.b16 %v128
    %v647 = vunpack.c.h.b16 %v128
    %v648 = vunpack.c.l.b16 %v129
    %v649 = vunpack.c.h.b16 %v129
    %v650 = vunpack.c.l.b16 %v130
    %v651 = vunpack.c.h.b16 %v130
    %v652 = vunpack.c.l.b16 %v131
    %v653 = vunpack.c.h.b16 %v131
    %v654 = vunpack.c.l.b16 %v132
    %v655 = vunpack.c.h.b16 %v132
    %v656 = vunpack.c.l.b16 %v133
    %v657 = vunpack.c.h.b16 %v133
    %v658 = vunpack.c.l.b16 %v134
    %v659 = vunpack.c.h.b16 %v134
    %v660 = vunpack.c.l.b16 %v135
    %v661 = vunpack.c.h.b16 %v135
    %v662 = vunpack.c.l.b16 %v136
    %v663 = vunpack.c.h.b16 %v136
    %v664 = vunpack.c.l.b16 %v137
    %v665 = vunpack.c.h.b16 %v137
    %v666 = vunpack.c.l.b16 %v138
    %v667 = vunpack.c.h.b16 %v138
    %v668 = vunpack.c.l.b16 %v139
    %v669 = vunpack.c.h.b16 %v139
    %v670 = vunpack.c.l.b16 %v140
    %v671 = vunpack.c.h.b16 %v140
    %v672 = vunpack.c.l.b16 %v141
    %v673 = vunpack.c.h.b16 %v141
    %v674 = vunpack.c.l.b16 %v142
    %v675 = vunpack.c.h.b16 %v142
    %v676 = vunpack.c.l.b16 %v143
    %v677 = vunpack.c.h.b16 %v143
    %v678 = vunpack.c.l.b16 %v144
    %v679 = vunpack.c.h.b16 %v144
    %v680 = vunpack.c.l.b16 %v145
    %v681 = vunpack.c.h.b16 %v145
    %v682 = vunpack.c.l.b16 %v146
    %v683 = vunpack.c.h.b16 %v146
    %v684 = vunpack.c.l.b16 %v147
    %v685 = vunpack.c.h.b16 %v147
    %v686 = vunpack.c.l.b16 %v148
    %v687 = vunpack.c.h.b16 %v148
    %v688 = vunpack.c.l.b16 %v149
    %v689 = vunpack.c.h.b16 %v149
    %v690 = vunpack.c.l.b16 %v150
    %v691 = vunpack.c.h.b16 %v150
    %v692 = vunpack.c.l.b16 %v151
    %v693 = vunpack.c.h.b16 %v151
    %v694 = vunpack.c.l.b16 %v152
    %v695 = vunpack.c.h.b16 %v152
    %v696 = vunpack.c.l.b16 %v153
    %v697 = vunpack.c.h.b16 %v153
    %v698 = vunpack.c.l.b16 %v154
    %v699 = vunpack.c.h.b16 %v154
    %v700 = vunpack.c.l.b16 %v155
    %v701 = vunpack.c.h.b16 %v155
    %v702 = vunpack.c.l.b16 %v156
    %v703 = vunpack.c.h.b16 %v156
    %v704 = vunpack.c.l.b16 %v157
    %v705 = vunpack.c.h.b16 %v157
    %v706 = vunpack.c.l.b16 %v158
    %v707 = vunpack.c.h.b16 %v158
    %v708 = vunpack.c.l.b16 %v159
    %v709 = vunpack.c.h.b16 %v159
    %v710 = vunpack.c.l.b16 %v160
    %v711 = vunpack.c.h.b16 %v160
    %v712 = vunpack.c.l.b16 %v161
    %v713 = vunpack.c.h.b16 %v161
    %v714 = vunpack.c.l.b16 %v162
    %v715 = vunpack.c.h.b16 %v162
    %v716 = vunpack.c.l.b16 %v163
    %v717 = vunpack.c.h.b16 %v163
    %v718 = vunpack.c.l.b16 %v164
    %v719 = vunpack.c.h.b16 %v164
    %v720 = vunpack.c.l.b16 %v165
    %v721 = vunpack.c.h.b16 %v165
    %v722 = vunpack.c.l.b16 %v166
    %v723 = vunpack.c.h.b16 %v166
    %v724 = vunpack.c.l.b16 %v167
    %v725 = vunpack.c.h.b16 %v167
    %v726 = vunpack.c.l.b16 %v168
    %v727 = vunpack.c.h.b16 %v168
    %v728 = vunpack.c.l.b16 %v169
    %v729 = vunpack.c.h.b16 %v169
    %v730 = vunpack.c.l.b16 %v170
    %v731 = vunpack.c.h.b16 %v170
    %v732 = vunpack.c.l.b16 %v171
    %v733 = vunpack.c.h.b16 %v171
    %v734 = vunpack.c.l.b16 %v172
    %v735 = vunpack.c.h.b16 %v172
    %v736 = vunpack.c.l.b16 %v173
    %v737 = vunpack.c.h.b16 %v173
    %v738 = vunpack.c.l.b16 %v174
    %v739 = vunpack.c.h.b16 %v174
    %v740 = vunpack.c.l.b16 %v175
    %v741 = vunpack.c.h.b16 %v175
    %v742 = vunpack.c.l.b16 %v176
    %v743 = vunpack.c.h.b16 %v176
    %v744 = vunpack.c.l.b16 %v177
    %v745 = vunpack.c.h.b16 %v177
    %v746 = vunpack.c.l.b16 %v178
    %v747 = vunpack.c.h.b16 %v178
    %v748 = vunpack.c.l.b16 %v179
    %v749 = vunpack.c.h.b16 %v179
    %v750 = vunpack.c.l.b16 %v180
    %v751 = vunpack.c.h.b16 %v180
    %v752 = vunpack.c.l.b16 %v181
    %v753 = vunpack.c.h.b16 %v181
    %v754 = vunpack.c.l.b16 %v182
    %v755 = vunpack.c.h.b16 %v182
    %v756 = vunpack.c.l.b16 %v183
    %v757 = vunpack.c.h.b16 %v183
    %v758 = vunpack.c.l.b16 %v184
    %v759 = vunpack.c.h.b16 %v184
    %v760 = vunpack.c.l.b16 %v185
    %v761 = vunpack.c.h.b16 %v185
    %v762 = vunpack.c.l.b16 %v186
    %v763 = vunpack.c.h.b16 %v186
    %v764 = vunpack.c.l.b16 %v187
    %v765 = vunpack.c.h.b16 %v187
    %v766 = vunpack.c.l.b16 %v188
    %v767 = vunpack.c.h.b16 %v188
    %v768 = vunpack.c.l.b16 %v189
    %v769 = vunpack.c.h.b16 %v189
    %v770 = vunpack.c.l.b16 %v190
    %v771 = vunpack.c.h.b16 %v190
    %v772 = vunpack.c.l.b16 %v191
    %v773 = vunpack.c.h.b16 %v191
    %v774 = vunpack.c.l.b16 %v192
    %v775 = vunpack.c.h.b16 %v192
    %v776 = vunpack.c.l.b16 %v193
    %v777 = vunpack.c.h.b16 %v193
    %v778 = vunpack.c.l.b16 %v194
    %v779 = vunpack.c.h.b16 %v194
    %v780 = vunpack.c.l.b16 %v195
    %v781 = vunpack.c.h.b16 %v195
    %v782 = vunpack.c.l.b16 %v196
    %v783 = vunpack.c.h.b16 %v196
    %v784 = vunpack.c.l.b16 %v197
    %v785 = vunpack.c.h.b16 %v197
    %v786 = vunpack.c.l.b16 %v198
    %v787 = vunpack.c.h.b16 %v198
    %v788 = vunpack.c.l.b16 %v199
    %v789 = vunpack.c.h.b16 %v199
    %v790 = vunpack.c.l.b16 %v200
    %v791 = vunpack.c.h.b16 %v200
    %v792 = vunpack.c.l.b16 %v201
    %v793 = vunpack.c.h.b16 %v201
    %v794 = vunpack.c.l.b16 %v202
    %v795 = vunpack.c.h.b16 %v202
    %v796 = vunpack.c.l.b16 %v203
    %v797 = vunpack.c.h.b16 %v203
    %v798 = vunpack.c.l.b16 %v204
    %v799 = vunpack.c.h.b16 %v204
    %v800 = vunpack.c.l.b16 %v205
    %v801 = vunpack.c.h.b16 %v205
    %v802 = vunpack.c.l.b16 %v206
    %v803 = vunpack.c.h.b16 %v206
    %v804 = vunpack.c.l.b16 %v207
    %v805 = vunpack.c.h.b16 %v207
    %v806 = vunpack.c.l.b16 %v208
    %v807 = vunpack.c.h.b16 %v208
    %v808 = vunpack.c.l.b16 %v209
    %v809 = vunpack.c.h.b16 %v209
    %v810 = vunpack.c.l.b16 %v210
    %v811 = vunpack.c.h.b16 %v210
    %v812 = vunpack.c.l.b16 %v211
    %v813 = vunpack.c.h.b16 %v211
    %v814 = vunpack.c.l.b16 %v212
    %v815 = vunpack.c.h.b16 %v212
    %v816 = vunpack.c.l.b16 %v213
    %v817 = vunpack.c.h.b16 %v213
    %v818 = vunpack.c.l.b16 %v214
    %v819 = vunpack.c.h.b16 %v214
    %v820 = vunpack.c.l.b16 %v215
    %v821 = vunpack.c.h.b16 %v215
    %v822 = vunpack.c.l.b16 %v216
    %v823 = vunpack.c.h.b16 %v216
    %v824 = vunpack.c.l.b16 %v217
    %v825 = vunpack.c.h.b16 %v217
    %v826 = vunpack.c.l.b16 %v218
    %v827 = vunpack.c.h.b16 %v218
    %v828 = vunpack.c.l.b16 %v219
    %v829 = vunpack.c.h.b16 %v219
    %v830 = vunpack.c.l.b16 %v220
    %v831 = vunpack.c.h.b16 %v220
    %v832 = vunpack.c.l.b16 %v221
    %v833 = vunpack.c.h.b16 %v221
    %v834 = vunpack.c.l.b16 %v222
    %v835 = vunpack.c.h.b16 %v222
    %v836 = vunpack.c.l.b16 %v223
    %v837 = vunpack.c.h.b16 %v223
    %v838 = vunpack.c.l.b16 %v224
    %v839 = vunpack.c.h.b16 %v224
    %v840 = vunpack.c.l.b16 %v225
    %v841 = vunpack.c.h.b16 %v225
    %v842 = vunpack.c.l.b16 %v226
    %v843 = vunpack.c.h.b16 %v226
    %v844 = vunpack.c.l.b16 %v227
    %v845 = vunpack.c.h.b16 %v227
    %v846 = vunpack.c.l.b16 %v228
    %v847 = vunpack.c.h.b16 %v228
    %v848 = vunpack.c.l.b16 %v229
    %v849 = vunpack.c.h.b16 %v229
    %v850 = vunpack.c.l.b16 %v230
    %v851 = vunpack.c.h.b16 %v230
    %v852 = vunpack.c.l.b16 %v231
    %v853 = vunpack.c.h.b16 %v231
    %v854 = vunpack.c.l.b16 %v232
    %v855 = vunpack.c.h.b16 %v232
    %v856 = vunpack.c.l.b16 %v233
    %v857 = vunpack.c.h.b16 %v233
    %v858 = vunpack.c.l.b16 %v234
    %v859 = vunpack.c.h.b16 %v234
    %v860 = vunpack.c.l.b16 %v235
    %v861 = vunpack.c.h.b16 %v235
    %v862 = vunpack.c.l.b16 %v236
    %v863 = vunpack.c.h.b16 %v236
    %v864 = vunpack.c.l.b16 %v237
    %v865 = vunpack.c.h.b16 %v237
    %v866 = vunpack.c.l.b16 %v238
    %v867 = vunpack.c.h.b16 %v238
    %v868 = vunpack.c.l.b16 %v239
    %v869 = vunpack.c.h.b16 %v239
    %v870 = vpack.c.b16 %v648, %v646
    %v871 = vpack.c.b16 %v649, %v647
    %v872 = vpack.c.b16 %v652, %v650
    %v873 = vpack.c.b16 %v653, %v651
    %v874 = vpack.c.b16 %v656, %v654
    %v875 = vpack.c.b16 %v657, %v655
    %v876 = vpack.c.b16 %v660, %v658
    %v877 = vpack.c.b16 %v661, %v659
    %v878 = vpack.c.b16 %v664, %v662
    %v879 = vpack.c.b16 %v665, %v663
    %v880 = vpack.c.b16 %v668, %v666
    %v881 = vpack.c.b16 %v669, %v667
    %v882 = vpack.c.b16 %v672, %v670
    %v883 = vpack.c.b16 %v673, %v671
    %v884 = vpack.c.b16 %v676, %v674
    %v885 = vpack.c.b16 %v677, %v675
    %v886 = vpack.c.b16 %v680, %v678
    %v887 = vpack.c.b16 %v681, %v679
    %v888 = vpack.c.b16 %v684, %v682
    %v889 = vpack.c.b16 %v685, %v683
    %v890 = vpack.c.b16 %v688, %v686
    %v891 = vpack.c.b16 %v689, %v687
    %v892 = vpack.c.b16 %v692, %v690
    %v893 = vpack.c.b16 %v693, %v691
    %v894 = vpack.c.b16 %v696, %v694
    %v895 = vpack.c.b16 %v697, %v695
    %v896 = vpack.c.b16 %v700, %v698
    %v897 = vpack.c.b16 %v701, %v699
    %v898 = vpack.c.b16 %v704, %v702
    %v899 = vpack.c.b16 %v705, %v703
    %v900 = vpack.c.b16 %v708, %v706
    %v901 = vpack.c.b16 %v709, %v707
    %v902 = vpack.c.b16 %v712, %v710
    %v903 = vpack.c.b16 %v713, %v711
    %v904 = vpack.c.b16 %v716, %v714
    %v905 = vpack.c.b16 %v717, %v715
    %v906 = vpack.c.b16 %v720, %v718
    %v907 = vpack.c.b16 %v721, %v719
    %v908 = vpack.c.b16 %v724, %v722
    %v909 = vpack.c.b16 %v725, %v723
    %v910 = vpack.c.b16 %v728, %v726
    %v911 = vpack.c.b16 %v729, %v727
    %v912 = vpack.c.b16 %v732, %v730
    %v913 = vpack.c.b16 %v733, %v731
    %v914 = vpack.c.b16 %v736, %v734
    %v915 = vpack.c.b16 %v737, %v735
    %v916 = vpack.c.b16 %v740, %v738
    %v917 = vpack.c.b16 %v741, %v739
    %v918 = vpack.c.b16 %v744, %v742
    %v919 = vpack.c.b16 %v745, %v743
    %v920 = vpack.c.b16 %v748, %v746
    %v921 = vpack.c.b16 %v749, %v747
    %v922 = vpack.c.b16 %v752, %v750
    %v923 = vpack.c.b16 %v753, %v751
    %v924 = vpack.c.b16 %v756, %v754
    %v925 = vpack.c.b16 %v757, %v755
    %v926 = vpack.c.b16 %v760, %v758
    %v927 = vpack.c.b16 %v761, %v759
    %v928 = vpack.c.b16 %v764, %v762
    %v929 = vpack.c.b16 %v765, %v763
    %v930 = vpack.c.b16 %v768, %v766
    %v931 = vpack.c.b16 %v769, %v767
    %v932 = vpack.c.b16 %v772, %v770
    %v933 = vpack.c.b16 %v773, %v771
    %v934 = vpack.c.b16 %v776, %v774
    %v935 = vpack.c.b16 %v777, %v775
    %v936 = vpack.c.b16 %v780, %v778
    %v937 = vpack.c.b16 %v781, %v779
    %v938 = vpack.c.b16 %v784, %v782
    %v939 = vpack.c.b16 %v785, %v783
    %v940 = vpack.c.b16 %v788, %v786
    %v941 = vpack.c.b16 %v789, %v787
    %v942 = vpack.c.b16 %v792, %v790
    %v943 = vpack.c.b16 %v793, %v791
    %v944 = vpack.c.b16 %v796, %v794
    %v945 = vpack.c.b16 %v797, %v795
    %v946 = vpack.c.b16 %v800, %v798
    %v947 = vpack.c.b16 %v801, %v799
    %v948 = vpack.c.b16 %v804, %v802
    %v949 = vpack.c.b16 %v805, %v803
    %v950 = vpack.c.b16 %v808, %v806
    %v951 = vpack.c.b16 %v809, %v807
    %v952 = vpack.c.b16 %v812, %v810
    %v953 = vpack.c.b16 %v813, %v811
    %v954 = vpack.c.b16 %v816, %v814
    %v955 = vpack.c.b16 %v817, %v815
    %v956 = vpack.c.b16 %v820, %v818
    %v957 = vpack.c.b16 %v821, %v819
    %v958 = vpack.c.b16 %v824, %v822
    %v959 = vpack.c.b16 %v825, %v823
    %v960 = vpack.c.b16 %v828, %v826
    %v961 = vpack.c.b16 %v829, %v827
    %v962 = vpack.c.b16 %v832, %v830
    %v963 = vpack.c.b16 %v833, %v831
    %v964 = vpack.c.b16 %v836, %v834
    %v965 = vpack.c.b16 %v837, %v835
    %v966 = vpack.c.b16 %v840, %v838
    %v967 = vpack.c.b16 %v841, %v839
    %v968 = vpack.c.b16 %v844, %v842
    %v969 = vpack.c.b16 %v845, %v843
    %v970 = vpack.c.b16 %v848, %v846
    %v971 = vpack.c.b16 %v849, %v847
    %v972 = vpack.c.b16 %v852, %v850
    %v973 = vpack.c.b16 %v853, %v851
    %v974 = vpack.c.b16 %v856, %v854
    %v975 = vpack.c.b16 %v857, %v855
    %v976 = vpack.c.b16 %v860, %v858
    %v977 = vpack.c.b16 %v861, %v859
    %v978 = vpack.c.b16 %v864, %v862
    %v979 = vpack.c.b16 %v865, %v863
    %v980 = vpack.c.b16 %v868, %v866
    %v981 = vpack.c.b16 %v869, %v867
    %1094 = vmatpush.bf16.msra.mxu0 %v884
    %1095 = vmatpush.bf16.msra.mxu0 %v882
    %1096 = vmatpush.bf16.msra.mxu0 %v880
    %1097 = vmatpush.bf16.msra.mxu0 %v878
    %1098 = vmatpush.bf16.msra.mxu0 %v876
    %1099 = vmatpush.bf16.msra.mxu0 %v874
    %1100 = vmatpush.bf16.msra.mxu0 %v872
    %1101 = vmatpush.bf16.msra.mxu0 %v870
    %1102 = vmatmul.bf16.gmra.mxu0 %v422
    %v1103 = vpop.f32.mrf.mxu0
    %v1104 = vadd.f32 %v242, %v1103
    %v1105 = vpop.f32.mrf.mxu0
    %v1106 = vadd.f32 %v242, %v1105
    %1107 = vmatmul.bf16.gmra.mxu0 %v429
    %v1108 = vpop.f32.mrf.mxu0
    %v1109 = vadd.f32 %v242, %v1108
    %v1110 = vpop.f32.mrf.mxu0
    %v1111 = vadd.f32 %v242, %v1110
    %1112 = vmatmul.bf16.gmra.mxu0 %v436
    %v1113 = vpop.f32.mrf.mxu0
    %v1114 = vadd.f32 %v242, %v1113
    %v1115 = vpop.f32.mrf.mxu0
    %v1116 = vadd.f32 %v242, %v1115
    %1117 = vmatmul.bf16.gmra.mxu0 %v443
    %v1118 = vpop.f32.mrf.mxu0
    %v1119 = vadd.f32 %v242, %v1118
    %v1120 = vpop.f32.mrf.mxu0
    %v1121 = vadd.f32 %v242, %v1120
    %1122 = vmatmul.bf16.gmra.mxu0 %v450
    %v1123 = vpop.f32.mrf.mxu0
    %v1124 = vadd.f32 %v242, %v1123
    %v1125 = vpop.f32.mrf.mxu0
    %v1126 = vadd.f32 %v242, %v1125
    %1127 = vmatmul.bf16.gmra.mxu0 %v457
    %v1128 = vpop.f32.mrf.mxu0
    %v1129 = vadd.f32 %v242, %v1128
    %v1130 = vpop.f32.mrf.mxu0
    %v1131 = vadd.f32 %v242, %v1130
    %1132 = vmatmul.bf16.gmra.mxu0 %v464
    %v1133 = vpop.f32.mrf.mxu0
    %v1134 = vadd.f32 %v242, %v1133
    %v1135 = vpop.f32.mrf.mxu0
    %v1136 = vadd.f32 %v242, %v1135
    %1137 = vmatmul.bf16.gmra.mxu0 %v471
    %v1138 = vpop.f32.mrf.mxu0
    %v1139 = vadd.f32 %v242, %v1138
    %v1140 = vpop.f32.mrf.mxu0
    %v1141 = vadd.f32 %v242, %v1140
    %1142 = vdwg.mxu0
    %1143 = vmatpush.bf16.msra.mxu0 %v900
    %1144 = vmatpush.bf16.msra.mxu0 %v898
    %1145 = vmatpush.bf16.msra.mxu0 %v896
    %1146 = vmatpush.bf16.msra.mxu0 %v894
    %1147 = vmatpush.bf16.msra.mxu0 %v892
    %1148 = vmatpush.bf16.msra.mxu0 %v890
    %1149 = vmatpush.bf16.msra.mxu0 %v888
    %1150 = vmatpush.bf16.msra.mxu0 %v886
    %1151 = vmatmul.bf16.gmra.mxu0 %v423
    %v1152 = vpop.f32.mrf.mxu0
    %v1153 = vadd.f32 %v1104, %v1152
    %v1154 = vpop.f32.mrf.mxu0
    %v1155 = vadd.f32 %v1106, %v1154
    %1156 = vmatmul.bf16.gmra.mxu0 %v430
    %v1157 = vpop.f32.mrf.mxu0
    %v1158 = vadd.f32 %v1109, %v1157
    %v1159 = vpop.f32.mrf.mxu0
    %v1160 = vadd.f32 %v1111, %v1159
    %1161 = vmatmul.bf16.gmra.mxu0 %v437
    %v1162 = vpop.f32.mrf.mxu0
    %v1163 = vadd.f32 %v1114, %v1162
    %v1164 = vpop.f32.mrf.mxu0
    %v1165 = vadd.f32 %v1116, %v1164
    %1166 = vmatmul.bf16.gmra.mxu0 %v444
    %v1167 = vpop.f32.mrf.mxu0
    %v1168 = vadd.f32 %v1119, %v1167
    %v1169 = vpop.f32.mrf.mxu0
    %v1170 = vadd.f32 %v1121, %v1169
    %1171 = vmatmul.bf16.gmra.mxu0 %v451
    %v1172 = vpop.f32.mrf.mxu0
    %v1173 = vadd.f32 %v1124, %v1172
    %v1174 = vpop.f32.mrf.mxu0
    %v1175 = vadd.f32 %v1126, %v1174
    %1176 = vmatmul.bf16.gmra.mxu0 %v458
    %v1177 = vpop.f32.mrf.mxu0
    %v1178 = vadd.f32 %v1129, %v1177
    %v1179 = vpop.f32.mrf.mxu0
    %v1180 = vadd.f32 %v1131, %v1179
    %1181 = vmatmul.bf16.gmra.mxu0 %v465
    %v1182 = vpop.f32.mrf.mxu0
    %v1183 = vadd.f32 %v1134, %v1182
    %v1184 = vpop.f32.mrf.mxu0
    %v1185 = vadd.f32 %v1136, %v1184
    %1186 = vmatmul.bf16.gmra.mxu0 %v472
    %v1187 = vpop.f32.mrf.mxu0
    %v1188 = vadd.f32 %v1139, %v1187
    %v1189 = vpop.f32.mrf.mxu0
    %v1190 = vadd.f32 %v1141, %v1189
    %1191 = vdwg.mxu0
    %1192 = vmatpush.bf16.msra.mxu0 %v916
    %1193 = vmatpush.bf16.msra.mxu0 %v914
    %1194 = vmatpush.bf16.msra.mxu0 %v912
    %1195 = vmatpush.bf16.msra.mxu0 %v910
    %1196 = vmatpush.bf16.msra.mxu0 %v908
    %1197 = vmatpush.bf16.msra.mxu0 %v906
    %1198 = vmatpush.bf16.msra.mxu0 %v904
    %1199 = vmatpush.bf16.msra.mxu0 %v902
    %1200 = vmatmul.bf16.gmra.mxu0 %v424
    %v1201 = vpop.f32.mrf.mxu0
    %v1202 = vadd.f32 %v1153, %v1201
    %v1203 = vpop.f32.mrf.mxu0
    %v1204 = vadd.f32 %v1155, %v1203
    %1205 = vmatmul.bf16.gmra.mxu0 %v431
    %v1206 = vpop.f32.mrf.mxu0
    %v1207 = vadd.f32 %v1158, %v1206
    %v1208 = vpop.f32.mrf.mxu0
    %v1209 = vadd.f32 %v1160, %v1208
    %1210 = vmatmul.bf16.gmra.mxu0 %v438
    %v1211 = vpop.f32.mrf.mxu0
    %v1212 = vadd.f32 %v1163, %v1211
    %v1213 = vpop.f32.mrf.mxu0
    %v1214 = vadd.f32 %v1165, %v1213
    %1215 = vmatmul.bf16.gmra.mxu0 %v445
    %v1216 = vpop.f32.mrf.mxu0
    %v1217 = vadd.f32 %v1168, %v1216
    %v1218 = vpop.f32.mrf.mxu0
    %v1219 = vadd.f32 %v1170, %v1218
    %1220 = vmatmul.bf16.gmra.mxu0 %v452
    %v1221 = vpop.f32.mrf.mxu0
    %v1222 = vadd.f32 %v1173, %v1221
    %v1223 = vpop.f32.mrf.mxu0
    %v1224 = vadd.f32 %v1175, %v1223
    %1225 = vmatmul.bf16.gmra.mxu0 %v459
    %v1226 = vpop.f32.mrf.mxu0
    %v1227 = vadd.f32 %v1178, %v1226
    %v1228 = vpop.f32.mrf.mxu0
    %v1229 = vadd.f32 %v1180, %v1228
    %1230 = vmatmul.bf16.gmra.mxu0 %v466
    %v1231 = vpop.f32.mrf.mxu0
    %v1232 = vadd.f32 %v1183, %v1231
    %v1233 = vpop.f32.mrf.mxu0
    %v1234 = vadd.f32 %v1185, %v1233
    %1235 = vmatmul.bf16.gmra.mxu0 %v473
    %v1236 = vpop.f32.mrf.mxu0
    %v1237 = vadd.f32 %v1188, %v1236
    %v1238 = vpop.f32.mrf.mxu0
    %v1239 = vadd.f32 %v1190, %v1238
    %1240 = vdwg.mxu0
    %1241 = vmatpush.bf16.msra.mxu0 %v932
    %1242 = vmatpush.bf16.msra.mxu0 %v930
    %1243 = vmatpush.bf16.msra.mxu0 %v928
    %1244 = vmatpush.bf16.msra.mxu0 %v926
    %1245 = vmatpush.bf16.msra.mxu0 %v924
    %1246 = vmatpush.bf16.msra.mxu0 %v922
    %1247 = vmatpush.bf16.msra.mxu0 %v920
    %1248 = vmatpush.bf16.msra.mxu0 %v918
    %1249 = vmatmul.bf16.gmra.mxu0 %v425
    %v1250 = vpop.f32.mrf.mxu0
    %v1251 = vadd.f32 %v1202, %v1250
    %v1252 = vpop.f32.mrf.mxu0
    %v1253 = vadd.f32 %v1204, %v1252
    %1254 = vmatmul.bf16.gmra.mxu0 %v432
    %v1255 = vpop.f32.mrf.mxu0
    %v1256 = vadd.f32 %v1207, %v1255
    %v1257 = vpop.f32.mrf.mxu0
    %v1258 = vadd.f32 %v1209, %v1257
    %1259 = vmatmul.bf16.gmra.mxu0 %v439
    %v1260 = vpop.f32.mrf.mxu0
    %v1261 = vadd.f32 %v1212, %v1260
    %v1262 = vpop.f32.mrf.mxu0
    %v1263 = vadd.f32 %v1214, %v1262
    %1264 = vmatmul.bf16.gmra.mxu0 %v446
    %v1265 = vpop.f32.mrf.mxu0
    %v1266 = vadd.f32 %v1217, %v1265
    %v1267 = vpop.f32.mrf.mxu0
    %v1268 = vadd.f32 %v1219, %v1267
    %1269 = vmatmul.bf16.gmra.mxu0 %v453
    %v1270 = vpop.f32.mrf.mxu0
    %v1271 = vadd.f32 %v1222, %v1270
    %v1272 = vpop.f32.mrf.mxu0
    %v1273 = vadd.f32 %v1224, %v1272
    %1274 = vmatmul.bf16.gmra.mxu0 %v460
    %v1275 = vpop.f32.mrf.mxu0
    %v1276 = vadd.f32 %v1227, %v1275
    %v1277 = vpop.f32.mrf.mxu0
    %v1278 = vadd.f32 %v1229, %v1277
    %1279 = vmatmul.bf16.gmra.mxu0 %v467
    %v1280 = vpop.f32.mrf.mxu0
    %v1281 = vadd.f32 %v1232, %v1280
    %v1282 = vpop.f32.mrf.mxu0
    %v1283 = vadd.f32 %v1234, %v1282
    %1284 = vmatmul.bf16.gmra.mxu0 %v474
    %v1285 = vpop.f32.mrf.mxu0
    %v1286 = vadd.f32 %v1237, %v1285
    %v1287 = vpop.f32.mrf.mxu0
    %v1288 = vadd.f32 %v1239, %v1287
    %1289 = vdwg.mxu0
    %1290 = vmatpush.bf16.msra.mxu0 %v948
    %1291 = vmatpush.bf16.msra.mxu0 %v946
    %1292 = vmatpush.bf16.msra.mxu0 %v944
    %1293 = vmatpush.bf16.msra.mxu0 %v942
    %1294 = vmatpush.bf16.msra.mxu0 %v940
    %1295 = vmatpush.bf16.msra.mxu0 %v938
    %1296 = vmatpush.bf16.msra.mxu0 %v936
    %1297 = vmatpush.bf16.msra.mxu0 %v934
    %1298 = vmatmul.bf16.gmra.mxu0 %v426
    %v1299 = vpop.f32.mrf.mxu0
    %v1300 = vadd.f32 %v1251, %v1299
    %v1301 = vpop.f32.mrf.mxu0
    %v1302 = vadd.f32 %v1253, %v1301
    %1303 = vmatmul.bf16.gmra.mxu0 %v433
    %v1304 = vpop.f32.mrf.mxu0
    %v1305 = vadd.f32 %v1256, %v1304
    %v1306 = vpop.f32.mrf.mxu0
    %v1307 = vadd.f32 %v1258, %v1306
    %1308 = vmatmul.bf16.gmra.mxu0 %v440
    %v1309 = vpop.f32.mrf.mxu0
    %v1310 = vadd.f32 %v1261, %v1309
    %v1311 = vpop.f32.mrf.mxu0
    %v1312 = vadd.f32 %v1263, %v1311
    %1313 = vmatmul.bf16.gmra.mxu0 %v447
    %v1314 = vpop.f32.mrf.mxu0
    %v1315 = vadd.f32 %v1266, %v1314
    %v1316 = vpop.f32.mrf.mxu0
    %v1317 = vadd.f32 %v1268, %v1316
    %1318 = vmatmul.bf16.gmra.mxu0 %v454
    %v1319 = vpop.f32.mrf.mxu0
    %v1320 = vadd.f32 %v1271, %v1319
    %v1321 = vpop.f32.mrf.mxu0
    %v1322 = vadd.f32 %v1273, %v1321
    %1323 = vmatmul.bf16.gmra.mxu0 %v461
    %v1324 = vpop.f32.mrf.mxu0
    %v1325 = vadd.f32 %v1276, %v1324
    %v1326 = vpop.f32.mrf.mxu0
    %v1327 = vadd.f32 %v1278, %v1326
    %1328 = vmatmul.bf16.gmra.mxu0 %v468
    %v1329 = vpop.f32.mrf.mxu0
    %v1330 = vadd.f32 %v1281, %v1329
    %v1331 = vpop.f32.mrf.mxu0
    %v1332 = vadd.f32 %v1283, %v1331
    %1333 = vmatmul.bf16.gmra.mxu0 %v475
    %v1334 = vpop.f32.mrf.mxu0
    %v1335 = vadd.f32 %v1286, %v1334
    %v1336 = vpop.f32.mrf.mxu0
    %v1337 = vadd.f32 %v1288, %v1336
    %1338 = vdwg.mxu0
    %1339 = vmatpush.bf16.msra.mxu0 %v964
    %1340 = vmatpush.bf16.msra.mxu0 %v962
    %1341 = vmatpush.bf16.msra.mxu0 %v960
    %1342 = vmatpush.bf16.msra.mxu0 %v958
    %1343 = vmatpush.bf16.msra.mxu0 %v956
    %1344 = vmatpush.bf16.msra.mxu0 %v954
    %1345 = vmatpush.bf16.msra.mxu0 %v952
    %1346 = vmatpush.bf16.msra.mxu0 %v950
    %1347 = vmatmul.bf16.gmra.mxu0 %v427
    %v1348 = vpop.f32.mrf.mxu0
    %v1349 = vadd.f32 %v1300, %v1348
    %v1350 = vpop.f32.mrf.mxu0
    %v1351 = vadd.f32 %v1302, %v1350
    %1352 = vmatmul.bf16.gmra.mxu0 %v434
    %v1353 = vpop.f32.mrf.mxu0
    %v1354 = vadd.f32 %v1305, %v1353
    %v1355 = vpop.f32.mrf.mxu0
    %v1356 = vadd.f32 %v1307, %v1355
    %1357 = vmatmul.bf16.gmra.mxu0 %v441
    %v1358 = vpop.f32.mrf.mxu0
    %v1359 = vadd.f32 %v1310, %v1358
    %v1360 = vpop.f32.mrf.mxu0
    %v1361 = vadd.f32 %v1312, %v1360
    %1362 = vmatmul.bf16.gmra.mxu0 %v448
    %v1363 = vpop.f32.mrf.mxu0
    %v1364 = vadd.f32 %v1315, %v1363
    %v1365 = vpop.f32.mrf.mxu0
    %v1366 = vadd.f32 %v1317, %v1365
    %1367 = vmatmul.bf16.gmra.mxu0 %v455
    %v1368 = vpop.f32.mrf.mxu0
    %v1369 = vadd.f32 %v1320, %v1368
    %v1370 = vpop.f32.mrf.mxu0
    %v1371 = vadd.f32 %v1322, %v1370
    %1372 = vmatmul.bf16.gmra.mxu0 %v462
    %v1373 = vpop.f32.mrf.mxu0
    %v1374 = vadd.f32 %v1325, %v1373
    %v1375 = vpop.f32.mrf.mxu0
    %v1376 = vadd.f32 %v1327, %v1375
    %1377 = vmatmul.bf16.gmra.mxu0 %v469
    %v1378 = vpop.f32.mrf.mxu0
    %v1379 = vadd.f32 %v1330, %v1378
    %v1380 = vpop.f32.mrf.mxu0
    %v1381 = vadd.f32 %v1332, %v1380
    %1382 = vmatmul.bf16.gmra.mxu0 %v476
    %v1383 = vpop.f32.mrf.mxu0
    %v1384 = vadd.f32 %v1335, %v1383
    %v1385 = vpop.f32.mrf.mxu0
    %v1386 = vadd.f32 %v1337, %v1385
    %1387 = vdwg.mxu0
    %1388 = vmatpush.bf16.msra.mxu0 %v980
    %1389 = vmatpush.bf16.msra.mxu0 %v978
    %1390 = vmatpush.bf16.msra.mxu0 %v976
    %1391 = vmatpush.bf16.msra.mxu0 %v974
    %1392 = vmatpush.bf16.msra.mxu0 %v972
    %1393 = vmatpush.bf16.msra.mxu0 %v970
    %1394 = vmatpush.bf16.msra.mxu0 %v968
    %1395 = vmatpush.bf16.msra.mxu0 %v966
    %1396 = vmatmul.bf16.gmra.mxu0 %v428
    %v1397 = vpop.f32.mrf.mxu0
    %v1398 = vadd.f32 %v1349, %v1397
    %v1399 = vpop.f32.mrf.mxu0
    %v1400 = vadd.f32 %v1351, %v1399
    %1401 = vmatmul.bf16.gmra.mxu0 %v435
    %v1402 = vpop.f32.mrf.mxu0
    %v1403 = vadd.f32 %v1354, %v1402
    %v1404 = vpop.f32.mrf.mxu0
    %v1405 = vadd.f32 %v1356, %v1404
    %1406 = vmatmul.bf16.gmra.mxu0 %v442
    %v1407 = vpop.f32.mrf.mxu0
    %v1408 = vadd.f32 %v1359, %v1407
    %v1409 = vpop.f32.mrf.mxu0
    %v1410 = vadd.f32 %v1361, %v1409
    %1411 = vmatmul.bf16.gmra.mxu0 %v449
    %v1412 = vpop.f32.mrf.mxu0
    %v1413 = vadd.f32 %v1364, %v1412
    %v1414 = vpop.f32.mrf.mxu0
    %v1415 = vadd.f32 %v1366, %v1414
    %1416 = vmatmul.bf16.gmra.mxu0 %v456
    %v1417 = vpop.f32.mrf.mxu0
    %v1418 = vadd.f32 %v1369, %v1417
    %v1419 = vpop.f32.mrf.mxu0
    %v1420 = vadd.f32 %v1371, %v1419
    %1421 = vmatmul.bf16.gmra.mxu0 %v463
    %v1422 = vpop.f32.mrf.mxu0
    %v1423 = vadd.f32 %v1374, %v1422
    %v1424 = vpop.f32.mrf.mxu0
    %v1425 = vadd.f32 %v1376, %v1424
    %1426 = vmatmul.bf16.gmra.mxu0 %v470
    %v1427 = vpop.f32.mrf.mxu0
    %v1428 = vadd.f32 %v1379, %v1427
    %v1429 = vpop.f32.mrf.mxu0
    %v1430 = vadd.f32 %v1381, %v1429
    %1431 = vmatmul.bf16.gmra.mxu0 %v477
    %v1432 = vpop.f32.mrf.mxu0
    %v1433 = vadd.f32 %v1384, %v1432
    %v1434 = vpop.f32.mrf.mxu0
    %v1435 = vadd.f32 %v1386, %v1434
    %1436 = vdwg.mxu0
    %1437 = vmatpush.bf16.msra.mxu0 %v885
    %1438 = vmatpush.bf16.msra.mxu0 %v883
    %1439 = vmatpush.bf16.msra.mxu0 %v881
    %1440 = vmatpush.bf16.msra.mxu0 %v879
    %1441 = vmatpush.bf16.msra.mxu0 %v877
    %1442 = vmatpush.bf16.msra.mxu0 %v875
    %1443 = vmatpush.bf16.msra.mxu0 %v873
    %1444 = vmatpush.bf16.msra.mxu0 %v871
    %1445 = vmatmul.bf16.gmra.mxu0 %v422
    %v1446 = vpop.f32.mrf.mxu0
    %v1447 = vadd.f32 %v243, %v1446
    %v1448 = vpop.f32.mrf.mxu0
    %v1449 = vadd.f32 %v243, %v1448
    %1450 = vmatmul.bf16.gmra.mxu0 %v429
    %v1451 = vpop.f32.mrf.mxu0
    %v1452 = vadd.f32 %v243, %v1451
    %v1453 = vpop.f32.mrf.mxu0
    %v1454 = vadd.f32 %v243, %v1453
    %1455 = vmatmul.bf16.gmra.mxu0 %v436
    %v1456 = vpop.f32.mrf.mxu0
    %v1457 = vadd.f32 %v243, %v1456
    %v1458 = vpop.f32.mrf.mxu0
    %v1459 = vadd.f32 %v243, %v1458
    %1460 = vmatmul.bf16.gmra.mxu0 %v443
    %v1461 = vpop.f32.mrf.mxu0
    %v1462 = vadd.f32 %v243, %v1461
    %v1463 = vpop.f32.mrf.mxu0
    %v1464 = vadd.f32 %v243, %v1463
    %1465 = vmatmul.bf16.gmra.mxu0 %v450
    %v1466 = vpop.f32.mrf.mxu0
    %v1467 = vadd.f32 %v243, %v1466
    %v1468 = vpop.f32.mrf.mxu0
    %v1469 = vadd.f32 %v243, %v1468
    %1470 = vmatmul.bf16.gmra.mxu0 %v457
    %v1471 = vpop.f32.mrf.mxu0
    %v1472 = vadd.f32 %v243, %v1471
    %v1473 = vpop.f32.mrf.mxu0
    %v1474 = vadd.f32 %v243, %v1473
    %1475 = vmatmul.bf16.gmra.mxu0 %v464
    %v1476 = vpop.f32.mrf.mxu0
    %v1477 = vadd.f32 %v243, %v1476
    %v1478 = vpop.f32.mrf.mxu0
    %v1479 = vadd.f32 %v243, %v1478
    %1480 = vmatmul.bf16.gmra.mxu0 %v471
    %v1481 = vpop.f32.mrf.mxu0
    %v1482 = vadd.f32 %v243, %v1481
    %v1483 = vpop.f32.mrf.mxu0
    %v1484 = vadd.f32 %v243, %v1483
    %1485 = vdwg.mxu0
    %1486 = vmatpush.bf16.msra.mxu0 %v901
    %1487 = vmatpush.bf16.msra.mxu0 %v899
    %1488 = vmatpush.bf16.msra.mxu0 %v897
    %1489 = vmatpush.bf16.msra.mxu0 %v895
    %1490 = vmatpush.bf16.msra.mxu0 %v893
    %1491 = vmatpush.bf16.msra.mxu0 %v891
    %1492 = vmatpush.bf16.msra.mxu0 %v889
    %1493 = vmatpush.bf16.msra.mxu0 %v887
    %1494 = vmatmul.bf16.gmra.mxu0 %v423
    %v1495 = vpop.f32.mrf.mxu0
    %v1496 = vadd.f32 %v1447, %v1495
    %v1497 = vpop.f32.mrf.mxu0
    %v1498 = vadd.f32 %v1449, %v1497
    %1499 = vmatmul.bf16.gmra.mxu0 %v430
    %v1500 = vpop.f32.mrf.mxu0
    %v1501 = vadd.f32 %v1452, %v1500
    %v1502 = vpop.f32.mrf.mxu0
    %v1503 = vadd.f32 %v1454, %v1502
    %1504 = vmatmul.bf16.gmra.mxu0 %v437
    %v1505 = vpop.f32.mrf.mxu0
    %v1506 = vadd.f32 %v1457, %v1505
    %v1507 = vpop.f32.mrf.mxu0
    %v1508 = vadd.f32 %v1459, %v1507
    %1509 = vmatmul.bf16.gmra.mxu0 %v444
    %v1510 = vpop.f32.mrf.mxu0
    %v1511 = vadd.f32 %v1462, %v1510
    %v1512 = vpop.f32.mrf.mxu0
    %v1513 = vadd.f32 %v1464, %v1512
    %1514 = vmatmul.bf16.gmra.mxu0 %v451
    %v1515 = vpop.f32.mrf.mxu0
    %v1516 = vadd.f32 %v1467, %v1515
    %v1517 = vpop.f32.mrf.mxu0
    %v1518 = vadd.f32 %v1469, %v1517
    %1519 = vmatmul.bf16.gmra.mxu0 %v458
    %v1520 = vpop.f32.mrf.mxu0
    %v1521 = vadd.f32 %v1472, %v1520
    %v1522 = vpop.f32.mrf.mxu0
    %v1523 = vadd.f32 %v1474, %v1522
    %1524 = vmatmul.bf16.gmra.mxu0 %v465
    %v1525 = vpop.f32.mrf.mxu0
    %v1526 = vadd.f32 %v1477, %v1525
    %v1527 = vpop.f32.mrf.mxu0
    %v1528 = vadd.f32 %v1479, %v1527
    %1529 = vmatmul.bf16.gmra.mxu0 %v472
    %v1530 = vpop.f32.mrf.mxu0
    %v1531 = vadd.f32 %v1482, %v1530
    %v1532 = vpop.f32.mrf.mxu0
    %v1533 = vadd.f32 %v1484, %v1532
    %1534 = vdwg.mxu0
    %1535 = vmatpush.bf16.msra.mxu0 %v917
    %1536 = vmatpush.bf16.msra.mxu0 %v915
    %1537 = vmatpush.bf16.msra.mxu0 %v913
    %1538 = vmatpush.bf16.msra.mxu0 %v911
    %1539 = vmatpush.bf16.msra.mxu0 %v909
    %1540 = vmatpush.bf16.msra.mxu0 %v907
    %1541 = vmatpush.bf16.msra.mxu0 %v905
    %1542 = vmatpush.bf16.msra.mxu0 %v903
    %1543 = vmatmul.bf16.gmra.mxu0 %v424
    %v1544 = vpop.f32.mrf.mxu0
    %v1545 = vadd.f32 %v1496, %v1544
    %v1546 = vpop.f32.mrf.mxu0
    %v1547 = vadd.f32 %v1498, %v1546
    %1548 = vmatmul.bf16.gmra.mxu0 %v431
    %v1549 = vpop.f32.mrf.mxu0
    %v1550 = vadd.f32 %v1501, %v1549
    %v1551 = vpop.f32.mrf.mxu0
    %v1552 = vadd.f32 %v1503, %v1551
    %1553 = vmatmul.bf16.gmra.mxu0 %v438
    %v1554 = vpop.f32.mrf.mxu0
    %v1555 = vadd.f32 %v1506, %v1554
    %v1556 = vpop.f32.mrf.mxu0
    %v1557 = vadd.f32 %v1508, %v1556
    %1558 = vmatmul.bf16.gmra.mxu0 %v445
    %v1559 = vpop.f32.mrf.mxu0
    %v1560 = vadd.f32 %v1511, %v1559
    %v1561 = vpop.f32.mrf.mxu0
    %v1562 = vadd.f32 %v1513, %v1561
    %1563 = vmatmul.bf16.gmra.mxu0 %v452
    %v1564 = vpop.f32.mrf.mxu0
    %v1565 = vadd.f32 %v1516, %v1564
    %v1566 = vpop.f32.mrf.mxu0
    %v1567 = vadd.f32 %v1518, %v1566
    %1568 = vmatmul.bf16.gmra.mxu0 %v459
    %v1569 = vpop.f32.mrf.mxu0
    %v1570 = vadd.f32 %v1521, %v1569
    %v1571 = vpop.f32.mrf.mxu0
    %v1572 = vadd.f32 %v1523, %v1571
    %1573 = vmatmul.bf16.gmra.mxu0 %v466
    %v1574 = vpop.f32.mrf.mxu0
    %v1575 = vadd.f32 %v1526, %v1574
    %v1576 = vpop.f32.mrf.mxu0
    %v1577 = vadd.f32 %v1528, %v1576
    %1578 = vmatmul.bf16.gmra.mxu0 %v473
    %v1579 = vpop.f32.mrf.mxu0
    %v1580 = vadd.f32 %v1531, %v1579
    %v1581 = vpop.f32.mrf.mxu0
    %v1582 = vadd.f32 %v1533, %v1581
    %1583 = vdwg.mxu0
    %1584 = vmatpush.bf16.msra.mxu0 %v933
    %1585 = vmatpush.bf16.msra.mxu0 %v931
    %1586 = vmatpush.bf16.msra.mxu0 %v929
    %1587 = vmatpush.bf16.msra.mxu0 %v927
    %1588 = vmatpush.bf16.msra.mxu0 %v925
    %1589 = vmatpush.bf16.msra.mxu0 %v923
    %1590 = vmatpush.bf16.msra.mxu0 %v921
    %1591 = vmatpush.bf16.msra.mxu0 %v919
    %1592 = vmatmul.bf16.gmra.mxu0 %v425
    %v1593 = vpop.f32.mrf.mxu0
    %v1594 = vadd.f32 %v1545, %v1593
    %v1595 = vpop.f32.mrf.mxu0
    %v1596 = vadd.f32 %v1547, %v1595
    %1597 = vmatmul.bf16.gmra.mxu0 %v432
    %v1598 = vpop.f32.mrf.mxu0
    %v1599 = vadd.f32 %v1550, %v1598
    %v1600 = vpop.f32.mrf.mxu0
    %v1601 = vadd.f32 %v1552, %v1600
    %1602 = vmatmul.bf16.gmra.mxu0 %v439
    %v1603 = vpop.f32.mrf.mxu0
    %v1604 = vadd.f32 %v1555, %v1603
    %v1605 = vpop.f32.mrf.mxu0
    %v1606 = vadd.f32 %v1557, %v1605
    %1607 = vmatmul.bf16.gmra.mxu0 %v446
    %v1608 = vpop.f32.mrf.mxu0
    %v1609 = vadd.f32 %v1560, %v1608
    %v1610 = vpop.f32.mrf.mxu0
    %v1611 = vadd.f32 %v1562, %v1610
    %1612 = vmatmul.bf16.gmra.mxu0 %v453
    %v1613 = vpop.f32.mrf.mxu0
    %v1614 = vadd.f32 %v1565, %v1613
    %v1615 = vpop.f32.mrf.mxu0
    %v1616 = vadd.f32 %v1567, %v1615
    %1617 = vmatmul.bf16.gmra.mxu0 %v460
    %v1618 = vpop.f32.mrf.mxu0
    %v1619 = vadd.f32 %v1570, %v1618
    %v1620 = vpop.f32.mrf.mxu0
    %v1621 = vadd.f32 %v1572, %v1620
    %1622 = vmatmul.bf16.gmra.mxu0 %v467
    %v1623 = vpop.f32.mrf.mxu0
    %v1624 = vadd.f32 %v1575, %v1623
    %v1625 = vpop.f32.mrf.mxu0
    %v1626 = vadd.f32 %v1577, %v1625
    %1627 = vmatmul.bf16.gmra.mxu0 %v474
    %v1628 = vpop.f32.mrf.mxu0
    %v1629 = vadd.f32 %v1580, %v1628
    %v1630 = vpop.f32.mrf.mxu0
    %v1631 = vadd.f32 %v1582, %v1630
    %1632 = vdwg.mxu0
    %1633 = vmatpush.bf16.msra.mxu0 %v949
    %1634 = vmatpush.bf16.msra.mxu0 %v947
    %1635 = vmatpush.bf16.msra.mxu0 %v945
    %1636 = vmatpush.bf16.msra.mxu0 %v943
    %1637 = vmatpush.bf16.msra.mxu0 %v941
    %1638 = vmatpush.bf16.msra.mxu0 %v939
    %1639 = vmatpush.bf16.msra.mxu0 %v937
    %1640 = vmatpush.bf16.msra.mxu0 %v935
    %1641 = vmatmul.bf16.gmra.mxu0 %v426
    %v1642 = vpop.f32.mrf.mxu0
    %v1643 = vadd.f32 %v1594, %v1642
    %v1644 = vpop.f32.mrf.mxu0
    %v1645 = vadd.f32 %v1596, %v1644
    %1646 = vmatmul.bf16.gmra.mxu0 %v433
    %v1647 = vpop.f32.mrf.mxu0
    %v1648 = vadd.f32 %v1599, %v1647
    %v1649 = vpop.f32.mrf.mxu0
    %v1650 = vadd.f32 %v1601, %v1649
    %1651 = vmatmul.bf16.gmra.mxu0 %v440
    %v1652 = vpop.f32.mrf.mxu0
    %v1653 = vadd.f32 %v1604, %v1652
    %v1654 = vpop.f32.mrf.mxu0
    %v1655 = vadd.f32 %v1606, %v1654
    %1656 = vmatmul.bf16.gmra.mxu0 %v447
    %v1657 = vpop.f32.mrf.mxu0
    %v1658 = vadd.f32 %v1609, %v1657
    %v1659 = vpop.f32.mrf.mxu0
    %v1660 = vadd.f32 %v1611, %v1659
    %1661 = vmatmul.bf16.gmra.mxu0 %v454
    %v1662 = vpop.f32.mrf.mxu0
    %v1663 = vadd.f32 %v1614, %v1662
    %v1664 = vpop.f32.mrf.mxu0
    %v1665 = vadd.f32 %v1616, %v1664
    %1666 = vmatmul.bf16.gmra.mxu0 %v461
    %v1667 = vpop.f32.mrf.mxu0
    %v1668 = vadd.f32 %v1619, %v1667
    %v1669 = vpop.f32.mrf.mxu0
    %v1670 = vadd.f32 %v1621, %v1669
    %1671 = vmatmul.bf16.gmra.mxu0 %v468
    %v1672 = vpop.f32.mrf.mxu0
    %v1673 = vadd.f32 %v1624, %v1672
    %v1674 = vpop.f32.mrf.mxu0
    %v1675 = vadd.f32 %v1626, %v1674
    %1676 = vmatmul.bf16.gmra.mxu0 %v475
    %v1677 = vpop.f32.mrf.mxu0
    %v1678 = vadd.f32 %v1629, %v1677
    %v1679 = vpop.f32.mrf.mxu0
    %v1680 = vadd.f32 %v1631, %v1679
    %1681 = vdwg.mxu0
    %1682 = vmatpush.bf16.msra.mxu0 %v965
    %1683 = vmatpush.bf16.msra.mxu0 %v963
    %1684 = vmatpush.bf16.msra.mxu0 %v961
    %1685 = vmatpush.bf16.msra.mxu0 %v959
    %1686 = vmatpush.bf16.msra.mxu0 %v957
    %1687 = vmatpush.bf16.msra.mxu0 %v955
    %1688 = vmatpush.bf16.msra.mxu0 %v953
    %1689 = vmatpush.bf16.msra.mxu0 %v951
    %1690 = vmatmul.bf16.gmra.mxu0 %v427
    %v1691 = vpop.f32.mrf.mxu0
    %v1692 = vadd.f32 %v1643, %v1691
    %v1693 = vpop.f32.mrf.mxu0
    %v1694 = vadd.f32 %v1645, %v1693
    %1695 = vmatmul.bf16.gmra.mxu0 %v434
    %v1696 = vpop.f32.mrf.mxu0
    %v1697 = vadd.f32 %v1648, %v1696
    %v1698 = vpop.f32.mrf.mxu0
    %v1699 = vadd.f32 %v1650, %v1698
    %1700 = vmatmul.bf16.gmra.mxu0 %v441
    %v1701 = vpop.f32.mrf.mxu0
    %v1702 = vadd.f32 %v1653, %v1701
    %v1703 = vpop.f32.mrf.mxu0
    %v1704 = vadd.f32 %v1655, %v1703
    %1705 = vmatmul.bf16.gmra.mxu0 %v448
    %v1706 = vpop.f32.mrf.mxu0
    %v1707 = vadd.f32 %v1658, %v1706
    %v1708 = vpop.f32.mrf.mxu0
    %v1709 = vadd.f32 %v1660, %v1708
    %1710 = vmatmul.bf16.gmra.mxu0 %v455
    %v1711 = vpop.f32.mrf.mxu0
    %v1712 = vadd.f32 %v1663, %v1711
    %v1713 = vpop.f32.mrf.mxu0
    %v1714 = vadd.f32 %v1665, %v1713
    %1715 = vmatmul.bf16.gmra.mxu0 %v462
    %v1716 = vpop.f32.mrf.mxu0
    %v1717 = vadd.f32 %v1668, %v1716
    %v1718 = vpop.f32.mrf.mxu0
    %v1719 = vadd.f32 %v1670, %v1718
    %1720 = vmatmul.bf16.gmra.mxu0 %v469
    %v1721 = vpop.f32.mrf.mxu0
    %v1722 = vadd.f32 %v1673, %v1721
    %v1723 = vpop.f32.mrf.mxu0
    %v1724 = vadd.f32 %v1675, %v1723
    %1725 = vmatmul.bf16.gmra.mxu0 %v476
    %v1726 = vpop.f32.mrf.mxu0
    %v1727 = vadd.f32 %v1678, %v1726
    %v1728 = vpop.f32.mrf.mxu0
    %v1729 = vadd.f32 %v1680, %v1728
    %1730 = vdwg.mxu0
    %1731 = vmatpush.bf16.msra.mxu0 %v981
    %1732 = vmatpush.bf16.msra.mxu0 %v979
    %1733 = vmatpush.bf16.msra.mxu0 %v977
    %1734 = vmatpush.bf16.msra.mxu0 %v975
    %1735 = vmatpush.bf16.msra.mxu0 %v973
    %1736 = vmatpush.bf16.msra.mxu0 %v971
    %1737 = vmatpush.bf16.msra.mxu0 %v969
    %1738 = vmatpush.bf16.msra.mxu0 %v967
    %1739 = vmatmul.bf16.gmra.mxu0 %v428
    %v1740 = vpop.f32.mrf.mxu0
    %v1741 = vadd.f32 %v1692, %v1740
    %v1742 = vpop.f32.mrf.mxu0
    %v1743 = vadd.f32 %v1694, %v1742
    %1744 = vmatmul.bf16.gmra.mxu0 %v435
    %v1745 = vpop.f32.mrf.mxu0
    %v1746 = vadd.f32 %v1697, %v1745
    %v1747 = vpop.f32.mrf.mxu0
    %v1748 = vadd.f32 %v1699, %v1747
    %1749 = vmatmul.bf16.gmra.mxu0 %v442
    %v1750 = vpop.f32.mrf.mxu0
    %v1751 = vadd.f32 %v1702, %v1750
    %v1752 = vpop.f32.mrf.mxu0
    %v1753 = vadd.f32 %v1704, %v1752
    %1754 = vmatmul.bf16.gmra.mxu0 %v449
    %v1755 = vpop.f32.mrf.mxu0
    %v1756 = vadd.f32 %v1707, %v1755
    %v1757 = vpop.f32.mrf.mxu0
    %v1758 = vadd.f32 %v1709, %v1757
    %1759 = vmatmul.bf16.gmra.mxu0 %v456
    %v1760 = vpop.f32.mrf.mxu0
    %v1761 = vadd.f32 %v1712, %v1760
    %v1762 = vpop.f32.mrf.mxu0
    %v1763 = vadd.f32 %v1714, %v1762
    %1764 = vmatmul.bf16.gmra.mxu0 %v463
    %v1765 = vpop.f32.mrf.mxu0
    %v1766 = vadd.f32 %v1717, %v1765
    %v1767 = vpop.f32.mrf.mxu0
    %v1768 = vadd.f32 %v1719, %v1767
    %1769 = vmatmul.bf16.gmra.mxu0 %v470
    %v1770 = vpop.f32.mrf.mxu0
    %v1771 = vadd.f32 %v1722, %v1770
    %v1772 = vpop.f32.mrf.mxu0
    %v1773 = vadd.f32 %v1724, %v1772
    %1774 = vmatmul.bf16.gmra.mxu0 %v477
    %v1775 = vpop.f32.mrf.mxu0
    %v1776 = vadd.f32 %v1727, %v1775
    %v1777 = vpop.f32.mrf.mxu0
    %v1778 = vadd.f32 %v1729, %v1777
    %1779 = vdwg.mxu0
    %v1780 = vmax.f32 %v1398, 0.0
    %v1781 = vmax.f32 %v1741, 0.0
    %v1782 = vmax.f32 %v1400, 0.0
    %v1783 = vmax.f32 %v1743, 0.0
    %v1784 = vmax.f32 %v1403, 0.0
    %v1785 = vmax.f32 %v1746, 0.0
    %v1786 = vmax.f32 %v1405, 0.0
    %v1787 = vmax.f32 %v1748, 0.0
    %v1788 = vmax.f32 %v1408, 0.0
    %v1789 = vmax.f32 %v1751, 0.0
    %v1790 = vmax.f32 %v1410, 0.0
    %v1791 = vmax.f32 %v1753, 0.0
    %v1792 = vmax.f32 %v1413, 0.0
    %v1793 = vmax.f32 %v1756, 0.0
    %v1794 = vmax.f32 %v1415, 0.0
    %v1795 = vmax.f32 %v1758, 0.0
    %v1796 = vmax.f32 %v1418, 0.0
    %v1797 = vmax.f32 %v1761, 0.0
    %v1798 = vmax.f32 %v1420, 0.0
    %v1799 = vmax.f32 %v1763, 0.0
    %v1800 = vmax.f32 %v1423, 0.0
    %v1801 = vmax.f32 %v1766, 0.0
    %v1802 = vmax.f32 %v1425, 0.0
    %v1803 = vmax.f32 %v1768, 0.0
    %v1804 = vmax.f32 %v1428, 0.0
    %v1805 = vmax.f32 %v1771, 0.0
    %v1806 = vmax.f32 %v1430, 0.0
    %v1807 = vmax.f32 %v1773, 0.0
    %v1808 = vmax.f32 %v1433, 0.0
    %v1809 = vmax.f32 %v1776, 0.0
    %v1810 = vmax.f32 %v1435, 0.0
    %v1811 = vmax.f32 %v1778, 0.0
    %v1812 = vpack.c.bf16 %v1782, %v1780
    %v1813 = vpack.c.bf16 %v1783, %v1781
    %v1814 = vpack.c.bf16 %v1786, %v1784
    %v1815 = vpack.c.bf16 %v1787, %v1785
    %v1816 = vpack.c.bf16 %v1790, %v1788
    %v1817 = vpack.c.bf16 %v1791, %v1789
    %v1818 = vpack.c.bf16 %v1794, %v1792
    %v1819 = vpack.c.bf16 %v1795, %v1793
    %v1820 = vpack.c.bf16 %v1798, %v1796
    %v1821 = vpack.c.bf16 %v1799, %v1797
    %v1822 = vpack.c.bf16 %v1802, %v1800
    %v1823 = vpack.c.bf16 %v1803, %v1801
    %v1824 = vpack.c.bf16 %v1806, %v1804
    %v1825 = vpack.c.bf16 %v1807, %v1805
    %v1826 = vpack.c.bf16 %v1810, %v1808
    %v1827 = vpack.c.bf16 %v1811, %v1809
    %v1828 = vld [vmem:[#allocation2] sm:$0xf]
    %v1829 = vld [vmem:[#allocation2 + $0x4] sm:$0xf]
    %v1830 = vld [vmem:[#allocation2 + $0x8] sm:$0xf]
    %v1831 = vld [vmem:[#allocation2 + $0xc] sm:$0xf]
    %v1832 = vld [vmem:[#allocation2 + $0x10] sm:$0xf]
    %v1833 = vld [vmem:[#allocation2 + $0x14] sm:$0xf]
    %v1834 = vld [vmem:[#allocation2 + $0x18] sm:$0xf]
    %v1835 = vld [vmem:[#allocation2 + $0x1c] sm:$0xf]
    %v1836 = vld [vmem:[#allocation2 + $0x20] sm:$0xf]
    %v1837 = vld [vmem:[#allocation2 + $0x24] sm:$0xf]
    %v1838 = vld [vmem:[#allocation2 + $0x28] sm:$0xf]
    %v1839 = vld [vmem:[#allocation2 + $0x2c] sm:$0xf]
    %v1840 = vld [vmem:[#allocation2 + $0x30] sm:$0xf]
    %v1841 = vld [vmem:[#allocation2 + $0x34] sm:$0xf]
    %v1842 = vld [vmem:[#allocation2 + $0x38] sm:$0xf]
    %v1843 = vld [vmem:[#allocation2 + $0x3c] sm:$0xf]
    %v1844 = vld [vmem:[#allocation2 + $0x40] sm:$0xf]
    %v1845 = vld [vmem:[#allocation2 + $0x44] sm:$0xf]
    %v1846 = vld [vmem:[#allocation2 + $0x48] sm:$0xf]
    %v1847 = vld [vmem:[#allocation2 + $0x4c] sm:$0xf]
    %v1848 = vld [vmem:[#allocation2 + $0x50] sm:$0xf]
    %v1849 = vld [vmem:[#allocation2 + $0x54] sm:$0xf]
    %v1850 = vld [vmem:[#allocation2 + $0x58] sm:$0xf]
    %v1851 = vld [vmem:[#allocation2 + $0x5c] sm:$0xf]
    %v1852 = vld [vmem:[#allocation2 + $0x60] sm:$0xf]
    %v1853 = vld [vmem:[#allocation2 + $0x64] sm:$0xf]
    %v1854 = vld [vmem:[#allocation2 + $0x68] sm:$0xf]
    %v1855 = vld [vmem:[#allocation2 + $0x6c] sm:$0xf]
    %v1856 = vld [vmem:[#allocation2 + $0x70] sm:$0xf]
    %v1857 = vld [vmem:[#allocation2 + $0x74] sm:$0xf]
    %v1858 = vld [vmem:[#allocation2 + $0x78] sm:$0xf]
    %v1859 = vld [vmem:[#allocation2 + $0x7c] sm:$0xf]
    %v1860 = vld [vmem:[%s4] sm:$0x1]
    %v1862 = vperm.slane %v1860, 0
    %v1896 = vunpack.c.l.b16 %v1828
    %v1897 = vunpack.c.l.b16 %v1829
    %v1898 = vunpack.c.l.b16 %v1830
    %v1899 = vunpack.c.l.b16 %v1831
    %v1900 = vunpack.c.l.b16 %v1832
    %v1901 = vunpack.c.l.b16 %v1833
    %v1902 = vunpack.c.l.b16 %v1834
    %v1903 = vunpack.c.l.b16 %v1835
    %v1904 = vunpack.c.l.b16 %v1836
    %v1905 = vunpack.c.l.b16 %v1837
    %v1906 = vunpack.c.l.b16 %v1838
    %v1907 = vunpack.c.l.b16 %v1839
    %v1908 = vunpack.c.l.b16 %v1840
    %v1909 = vunpack.c.l.b16 %v1841
    %v1910 = vunpack.c.l.b16 %v1842
    %v1911 = vunpack.c.l.b16 %v1843
    %v1912 = vunpack.c.l.b16 %v1844
    %v1913 = vunpack.c.l.b16 %v1845
    %v1914 = vunpack.c.l.b16 %v1846
    %v1915 = vunpack.c.l.b16 %v1847
    %v1916 = vunpack.c.l.b16 %v1848
    %v1917 = vunpack.c.l.b16 %v1849
    %v1918 = vunpack.c.l.b16 %v1850
    %v1919 = vunpack.c.l.b16 %v1851
    %v1920 = vunpack.c.l.b16 %v1852
    %v1921 = vunpack.c.l.b16 %v1853
    %v1922 = vunpack.c.l.b16 %v1854
    %v1923 = vunpack.c.l.b16 %v1855
    %v1924 = vunpack.c.l.b16 %v1856
    %v1925 = vunpack.c.l.b16 %v1857
    %v1926 = vunpack.c.l.b16 %v1858
    %v1927 = vunpack.c.l.b16 %v1859
    %v1928 = vpack.c.b16 %v1897, %v1896
    %v1929 = vpack.c.b16 %v1899, %v1898
    %v1930 = vpack.c.b16 %v1901, %v1900
    %v1931 = vpack.c.b16 %v1903, %v1902
    %v1932 = vpack.c.b16 %v1905, %v1904
    %v1933 = vpack.c.b16 %v1907, %v1906
    %v1934 = vpack.c.b16 %v1909, %v1908
    %v1935 = vpack.c.b16 %v1911, %v1910
    %v1936 = vpack.c.b16 %v1913, %v1912
    %v1937 = vpack.c.b16 %v1915, %v1914
    %v1938 = vpack.c.b16 %v1917, %v1916
    %v1939 = vpack.c.b16 %v1919, %v1918
    %v1940 = vpack.c.b16 %v1921, %v1920
    %v1941 = vpack.c.b16 %v1923, %v1922
    %v1942 = vpack.c.b16 %v1925, %v1924
    %v1943 = vpack.c.b16 %v1927, %v1926
    %1960 = vmatpush.bf16.msra.mxu0 %v1935
    %1961 = vmatpush.bf16.msra.mxu0 %v1934
    %1962 = vmatpush.bf16.msra.mxu0 %v1933
    %1963 = vmatpush.bf16.msra.mxu0 %v1932
    %1964 = vmatpush.bf16.msra.mxu0 %v1931
    %1965 = vmatpush.bf16.msra.mxu0 %v1930
    %1966 = vmatpush.bf16.msra.mxu0 %v1929
    %1967 = vmatpush.bf16.msra.mxu0 %v1928
    %1968 = vmatmul.bf16.gmra.mxu0 %v1812
    %v1969 = vpop.f32.mrf.mxu0
    %v1970 = vadd.f32 %v1862, %v1969
    %v1971 = vpop.f32.mrf.mxu0
    %v1972 = vadd.f32 %v1862, %v1971
    %1973 = vmatmul.bf16.gmra.mxu0 %v1814
    %v1974 = vpop.f32.mrf.mxu0
    %v1975 = vadd.f32 %v1862, %v1974
    %v1976 = vpop.f32.mrf.mxu0
    %v1977 = vadd.f32 %v1862, %v1976
    %1978 = vmatmul.bf16.gmra.mxu0 %v1816
    %v1979 = vpop.f32.mrf.mxu0
    %v1980 = vadd.f32 %v1862, %v1979
    %v1981 = vpop.f32.mrf.mxu0
    %v1982 = vadd.f32 %v1862, %v1981
    %1983 = vmatmul.bf16.gmra.mxu0 %v1818
    %v1984 = vpop.f32.mrf.mxu0
    %v1985 = vadd.f32 %v1862, %v1984
    %v1986 = vpop.f32.mrf.mxu0
    %v1987 = vadd.f32 %v1862, %v1986
    %1988 = vmatmul.bf16.gmra.mxu0 %v1820
    %v1989 = vpop.f32.mrf.mxu0
    %v1990 = vadd.f32 %v1862, %v1989
    %v1991 = vpop.f32.mrf.mxu0
    %v1992 = vadd.f32 %v1862, %v1991
    %1993 = vmatmul.bf16.gmra.mxu0 %v1822
    %v1994 = vpop.f32.mrf.mxu0
    %v1995 = vadd.f32 %v1862, %v1994
    %v1996 = vpop.f32.mrf.mxu0
    %v1997 = vadd.f32 %v1862, %v1996
    %1998 = vmatmul.bf16.gmra.mxu0 %v1824
    %v1999 = vpop.f32.mrf.mxu0
    %v2000 = vadd.f32 %v1862, %v1999
    %v2001 = vpop.f32.mrf.mxu0
    %v2002 = vadd.f32 %v1862, %v2001
    %2003 = vmatmul.bf16.gmra.mxu0 %v1826
    %v2004 = vpop.f32.mrf.mxu0
    %v2005 = vadd.f32 %v1862, %v2004
    %v2006 = vpop.f32.mrf.mxu0
    %v2007 = vadd.f32 %v1862, %v2006
    %2008 = vdwg.mxu0
    %2009 = vmatpush.bf16.msra.mxu0 %v1943
    %2010 = vmatpush.bf16.msra.mxu0 %v1942
    %2011 = vmatpush.bf16.msra.mxu0 %v1941
    %2012 = vmatpush.bf16.msra.mxu0 %v1940
    %2013 = vmatpush.bf16.msra.mxu0 %v1939
    %2014 = vmatpush.bf16.msra.mxu0 %v1938
    %2015 = vmatpush.bf16.msra.mxu0 %v1937
    %2016 = vmatpush.bf16.msra.mxu0 %v1936
    %2017 = vmatmul.bf16.gmra.mxu0 %v1813
    %v2018 = vpop.f32.mrf.mxu0
    %v2019 = vadd.f32 %v1970, %v2018
    %v2020 = vpop.f32.mrf.mxu0
    %v2021 = vadd.f32 %v1972, %v2020
    %2022 = vmatmul.bf16.gmra.mxu0 %v1815
    %v2023 = vpop.f32.mrf.mxu0
    %v2024 = vadd.f32 %v1975, %v2023
    %v2025 = vpop.f32.mrf.mxu0
    %v2026 = vadd.f32 %v1977, %v2025
    %2027 = vmatmul.bf16.gmra.mxu0 %v1817
    %v2028 = vpop.f32.mrf.mxu0
    %v2029 = vadd.f32 %v1980, %v2028
    %v2030 = vpop.f32.mrf.mxu0
    %v2031 = vadd.f32 %v1982, %v2030
    %2032 = vmatmul.bf16.gmra.mxu0 %v1819
    %v2033 = vpop.f32.mrf.mxu0
    %v2034 = vadd.f32 %v1985, %v2033
    %v2035 = vpop.f32.mrf.mxu0
    %v2036 = vadd.f32 %v1987, %v2035
    %2037 = vmatmul.bf16.gmra.mxu0 %v1821
    %v2038 = vpop.f32.mrf.mxu0
    %v2039 = vadd.f32 %v1990, %v2038
    %v2040 = vpop.f32.mrf.mxu0
    %v2041 = vadd.f32 %v1992, %v2040
    %2042 = vmatmul.bf16.gmra.mxu0 %v1823
    %v2043 = vpop.f32.mrf.mxu0
    %v2044 = vadd.f32 %v1995, %v2043
    %v2045 = vpop.f32.mrf.mxu0
    %v2046 = vadd.f32 %v1997, %v2045
    %2047 = vmatmul.bf16.gmra.mxu0 %v1825
    %v2048 = vpop.f32.mrf.mxu0
    %v2049 = vadd.f32 %v2000, %v2048
    %v2050 = vpop.f32.mrf.mxu0
    %v2051 = vadd.f32 %v2002, %v2050
    %2052 = vmatmul.bf16.gmra.mxu0 %v1827
    %v2053 = vpop.f32.mrf.mxu0
    %v2054 = vadd.f32 %v2005, %v2053
    %v2055 = vpop.f32.mrf.mxu0
    %v2056 = vadd.f32 %v2007, %v2055
    %2057 = vdwg.mxu0
    %v2058 = vmax.f32 %v2019, 0.0
    %v2059 = vmax.f32 %v2021, 0.0
    %v2060 = vmax.f32 %v2024, 0.0
    %v2061 = vmax.f32 %v2026, 0.0
    %v2062 = vmax.f32 %v2029, 0.0
    %v2063 = vmax.f32 %v2031, 0.0
    %v2064 = vmax.f32 %v2034, 0.0
    %v2065 = vmax.f32 %v2036, 0.0
    %v2066 = vmax.f32 %v2039, 0.0
    %v2067 = vmax.f32 %v2041, 0.0
    %v2068 = vmax.f32 %v2044, 0.0
    %v2069 = vmax.f32 %v2046, 0.0
    %v2070 = vmax.f32 %v2049, 0.0
    %v2071 = vmax.f32 %v2051, 0.0
    %v2072 = vmax.f32 %v2054, 0.0
    %v2073 = vmax.f32 %v2056, 0.0
    %v2074 = vpack.c.bf16 %v2059, %v2058
    %v2075 = vpack.c.bf16 %v2061, %v2060
    %v2076 = vpack.c.bf16 %v2063, %v2062
    %v2077 = vpack.c.bf16 %v2065, %v2064
    %v2078 = vpack.c.bf16 %v2067, %v2066
    %v2079 = vpack.c.bf16 %v2069, %v2068
    %v2080 = vpack.c.bf16 %v2071, %v2070
    %v2081 = vpack.c.bf16 %v2073, %v2072
    %v2082 = vld [vmem:[%s5] sm:$0xf]
    %v2083 = vld [vmem:[%s5 + $0x4] sm:$0xf]
    %v2084 = vld [vmem:[%s5 + $0x8] sm:$0xf]
    %v2085 = vld [vmem:[%s5 + $0xc] sm:$0xf]
    %v2086 = vld [vmem:[%s5 + $0x10] sm:$0xf]
    %v2087 = vld [vmem:[%s5 + $0x14] sm:$0xf]
    %v2088 = vld [vmem:[%s5 + $0x18] sm:$0xf]
    %v2089 = vld [vmem:[%s5 + $0x1c] sm:$0xf]
    %v2090 = vld [vmem:[%s5 + $0x20] sm:$0xf]
    %v2091 = vld [vmem:[%s5 + $0x24] sm:$0xf]
    %v2092 = vld [vmem:[%s5 + $0x28] sm:$0xf]
    %v2093 = vld [vmem:[%s5 + $0x2c] sm:$0xf]
    %v2094 = vld [vmem:[%s5 + $0x30] sm:$0xf]
    %v2095 = vld [vmem:[%s5 + $0x34] sm:$0xf]
    %v2096 = vld [vmem:[%s5 + $0x38] sm:$0xf]
    %v2097 = vld [vmem:[%s5 + $0x3c] sm:$0xf]
    %v2098 = vld [vmem:[%s6] sm:$0x1]
    %v2100 = vperm.slane %v2098, 0
    %v2118 = vunpack.c.l.b16 %v2082
    %v2119 = vunpack.c.l.b16 %v2083
    %v2120 = vunpack.c.l.b16 %v2084
    %v2121 = vunpack.c.l.b16 %v2085
    %v2122 = vunpack.c.l.b16 %v2086
    %v2123 = vunpack.c.l.b16 %v2087
    %v2124 = vunpack.c.l.b16 %v2088
    %v2125 = vunpack.c.l.b16 %v2089
    %v2126 = vunpack.c.l.b16 %v2090
    %v2127 = vunpack.c.l.b16 %v2091
    %v2128 = vunpack.c.l.b16 %v2092
    %v2129 = vunpack.c.l.b16 %v2093
    %v2130 = vunpack.c.l.b16 %v2094
    %v2131 = vunpack.c.l.b16 %v2095
    %v2132 = vunpack.c.l.b16 %v2096
    %v2133 = vunpack.c.l.b16 %v2097
    %v2134 = vpack.c.b16 %v2119, %v2118
    %v2135 = vpack.c.b16 %v2121, %v2120
    %v2136 = vpack.c.b16 %v2123, %v2122
    %v2137 = vpack.c.b16 %v2125, %v2124
    %v2138 = vpack.c.b16 %v2127, %v2126
    %v2139 = vpack.c.b16 %v2129, %v2128
    %v2140 = vpack.c.b16 %v2131, %v2130
    %v2141 = vpack.c.b16 %v2133, %v2132
    %2150 = vmatpush.bf16.msra.mxu0 %v2141
    %2151 = vmatpush.bf16.msra.mxu0 %v2140
    %2152 = vmatpush.bf16.msra.mxu0 %v2139
    %2153 = vmatpush.bf16.msra.mxu0 %v2138
    %2154 = vmatpush.bf16.msra.mxu0 %v2137
    %2155 = vmatpush.bf16.msra.mxu0 %v2136
    %2156 = vmatpush.bf16.msra.mxu0 %v2135
    %2157 = vmatpush.bf16.msra.mxu0 %v2134
    %2158 = vmatmul.bf16.gmra.mxu0 %v2074
    %v2159 = vpop.f32.mrf.mxu0
    %v2160 = vadd.f32 %v2100, %v2159
    %v2161 = vpop.f32.mrf.mxu0
    %v2162 = vadd.f32 %v2100, %v2161
    %2163 = vmatmul.bf16.gmra.mxu0 %v2075
    %v2164 = vpop.f32.mrf.mxu0
    %v2165 = vadd.f32 %v2100, %v2164
    %v2166 = vpop.f32.mrf.mxu0
    %v2167 = vadd.f32 %v2100, %v2166
    %2168 = vmatmul.bf16.gmra.mxu0 %v2076
    %v2169 = vpop.f32.mrf.mxu0
    %v2170 = vadd.f32 %v2100, %v2169
    %v2171 = vpop.f32.mrf.mxu0
    %v2172 = vadd.f32 %v2100, %v2171
    %2173 = vmatmul.bf16.gmra.mxu0 %v2077
    %v2174 = vpop.f32.mrf.mxu0
    %v2175 = vadd.f32 %v2100, %v2174
    %v2176 = vpop.f32.mrf.mxu0
    %v2177 = vadd.f32 %v2100, %v2176
    %2178 = vmatmul.bf16.gmra.mxu0 %v2078
    %v2179 = vpop.f32.mrf.mxu0
    %v2180 = vadd.f32 %v2100, %v2179
    %v2181 = vpop.f32.mrf.mxu0
    %v2182 = vadd.f32 %v2100, %v2181
    %2183 = vmatmul.bf16.gmra.mxu0 %v2079
    %v2184 = vpop.f32.mrf.mxu0
    %v2185 = vadd.f32 %v2100, %v2184
    %v2186 = vpop.f32.mrf.mxu0
    %v2187 = vadd.f32 %v2100, %v2186
    %2188 = vmatmul.bf16.gmra.mxu0 %v2080
    %v2189 = vpop.f32.mrf.mxu0
    %v2190 = vadd.f32 %v2100, %v2189
    %v2191 = vpop.f32.mrf.mxu0
    %v2192 = vadd.f32 %v2100, %v2191
    %2193 = vmatmul.bf16.gmra.mxu0 %v2081
    %v2194 = vpop.f32.mrf.mxu0
    %v2195 = vadd.f32 %v2100, %v2194
    %v2196 = vpop.f32.mrf.mxu0
    %v2197 = vadd.f32 %v2100, %v2196
    %2198 = vdwg.mxu0
    %v2199 = vmax.f32 %v2160, 0.0
    %v2200 = vmax.f32 %v2162, 0.0
    %v2201 = vmax.f32 %v2165, 0.0
    %v2202 = vmax.f32 %v2167, 0.0
    %v2203 = vmax.f32 %v2170, 0.0
    %v2204 = vmax.f32 %v2172, 0.0
    %v2205 = vmax.f32 %v2175, 0.0
    %v2206 = vmax.f32 %v2177, 0.0
    %v2207 = vmax.f32 %v2180, 0.0
    %v2208 = vmax.f32 %v2182, 0.0
    %v2209 = vmax.f32 %v2185, 0.0
    %v2210 = vmax.f32 %v2187, 0.0
    %v2211 = vmax.f32 %v2190, 0.0
    %v2212 = vmax.f32 %v2192, 0.0
    %v2213 = vmax.f32 %v2195, 0.0
    %v2214 = vmax.f32 %v2197, 0.0
    %v2215 = vpack.c.bf16 %v2200, %v2199
    %v2216 = vpack.c.bf16 %v2202, %v2201
    %v2217 = vpack.c.bf16 %v2204, %v2203
    %v2218 = vpack.c.bf16 %v2206, %v2205
    %v2219 = vpack.c.bf16 %v2208, %v2207
    %v2220 = vpack.c.bf16 %v2210, %v2209
    %v2221 = vpack.c.bf16 %v2212, %v2211
    %v2222 = vpack.c.bf16 %v2214, %v2213
    %v2223 = vld [vmem:[#allocation4] sm:$0xf]
    %v2224 = vld [vmem:[#allocation4 + $0x4] sm:$0xf]
    %v2225 = vld [vmem:[#allocation4 + $0x8] sm:$0xf]
    %v2226 = vld [vmem:[#allocation4 + $0xc] sm:$0xf]
    %v2227 = vld [vmem:[#allocation4 + $0x10] sm:$0xf]
    %v2228 = vld [vmem:[#allocation4 + $0x14] sm:$0xf]
    %v2229 = vld [vmem:[#allocation4 + $0x18] sm:$0xf]
    %v2230 = vld [vmem:[#allocation4 + $0x1c] sm:$0xf]
    %v2231 = vld [vmem:[#allocation4 + $0x20] sm:$0xf]
    %v2232 = vld [vmem:[#allocation4 + $0x24] sm:$0xf]
    %v2233 = vld [vmem:[#allocation4 + $0x28] sm:$0xf]
    %v2234 = vld [vmem:[#allocation4 + $0x2c] sm:$0xf]
    %v2235 = vld [vmem:[#allocation4 + $0x30] sm:$0xf]
    %v2236 = vld [vmem:[#allocation4 + $0x34] sm:$0xf]
    %v2237 = vld [vmem:[#allocation4 + $0x38] sm:$0xf]
    %v2238 = vld [vmem:[#allocation4 + $0x3c] sm:$0xf]
    %v2239 = vld [vmem:[%s8] sm:$0x1]
    %v2241 = vperm.slane %v2239, 0
    %v2259 = vunpack.c.l.b16 %v2223
    %v2260 = vunpack.c.l.b16 %v2224
    %v2261 = vunpack.c.l.b16 %v2225
    %v2262 = vunpack.c.l.b16 %v2226
    %v2263 = vunpack.c.l.b16 %v2227
    %v2264 = vunpack.c.l.b16 %v2228
    %v2265 = vunpack.c.l.b16 %v2229
    %v2266 = vunpack.c.l.b16 %v2230
    %v2267 = vunpack.c.l.b16 %v2231
    %v2268 = vunpack.c.l.b16 %v2232
    %v2269 = vunpack.c.l.b16 %v2233
    %v2270 = vunpack.c.l.b16 %v2234
    %v2271 = vunpack.c.l.b16 %v2235
    %v2272 = vunpack.c.l.b16 %v2236
    %v2273 = vunpack.c.l.b16 %v2237
    %v2274 = vunpack.c.l.b16 %v2238
    %v2275 = vpack.c.b16 %v2260, %v2259
    %v2276 = vpack.c.b16 %v2262, %v2261
    %v2277 = vpack.c.b16 %v2264, %v2263
    %v2278 = vpack.c.b16 %v2266, %v2265
    %v2279 = vpack.c.b16 %v2268, %v2267
    %v2280 = vpack.c.b16 %v2270, %v2269
    %v2281 = vpack.c.b16 %v2272, %v2271
    %v2282 = vpack.c.b16 %v2274, %v2273
    %2291 = vmatpush.bf16.msra.mxu0 %v2282
    %2292 = vmatpush.bf16.msra.mxu0 %v2281
    %2293 = vmatpush.bf16.msra.mxu0 %v2280
    %2294 = vmatpush.bf16.msra.mxu0 %v2279
    %2295 = vmatpush.bf16.msra.mxu0 %v2278
    %2296 = vmatpush.bf16.msra.mxu0 %v2277
    %2297 = vmatpush.bf16.msra.mxu0 %v2276
    %2298 = vmatpush.bf16.msra.mxu0 %v2275
    %2299 = vmatmul.bf16.gmra.mxu0 %v2215
    %v2300 = vpop.f32.mrf.mxu0
    %v2301 = vadd.f32 %v2241, %v2300
    %v2302 = vpop.f32.mrf.mxu0
    %v2303 = vadd.f32 %v2241, %v2302
    %2304 = vmatmul.bf16.gmra.mxu0 %v2216
    %v2305 = vpop.f32.mrf.mxu0
    %v2306 = vadd.f32 %v2241, %v2305
    %v2307 = vpop.f32.mrf.mxu0
    %v2308 = vadd.f32 %v2241, %v2307
    %2309 = vmatmul.bf16.gmra.mxu0 %v2217
    %v2310 = vpop.f32.mrf.mxu0
    %v2311 = vadd.f32 %v2241, %v2310
    %v2312 = vpop.f32.mrf.mxu0
    %v2313 = vadd.f32 %v2241, %v2312
    %2314 = vmatmul.bf16.gmra.mxu0 %v2218
    %v2315 = vpop.f32.mrf.mxu0
    %v2316 = vadd.f32 %v2241, %v2315
    %v2317 = vpop.f32.mrf.mxu0
    %v2318 = vadd.f32 %v2241, %v2317
    %2319 = vmatmul.bf16.gmra.mxu0 %v2219
    %v2320 = vpop.f32.mrf.mxu0
    %v2321 = vadd.f32 %v2241, %v2320
    %v2322 = vpop.f32.mrf.mxu0
    %v2323 = vadd.f32 %v2241, %v2322
    %2324 = vmatmul.bf16.gmra.mxu0 %v2220
    %v2325 = vpop.f32.mrf.mxu0
    %v2326 = vadd.f32 %v2241, %v2325
    %v2327 = vpop.f32.mrf.mxu0
    %v2328 = vadd.f32 %v2241, %v2327
    %2329 = vmatmul.bf16.gmra.mxu0 %v2221
    %v2330 = vpop.f32.mrf.mxu0
    %v2331 = vadd.f32 %v2241, %v2330
    %v2332 = vpop.f32.mrf.mxu0
    %v2333 = vadd.f32 %v2241, %v2332
    %2334 = vmatmul.bf16.gmra.mxu0 %v2222
    %v2335 = vpop.f32.mrf.mxu0
    %v2336 = vadd.f32 %v2241, %v2335
    %v2337 = vpop.f32.mrf.mxu0
    %v2338 = vadd.f32 %v2241, %v2337
    %2339 = vdwg.mxu0
    %2340 = vst [vmem:[%s9] sm:$0xff] %v2301
    %2341 = vst [vmem:[%s9 + $0x8] sm:$0xff] %v2303
    %2342 = vst [vmem:[%s9 + $0x10] sm:$0xff] %v2306
    %2343 = vst [vmem:[%s9 + $0x18] sm:$0xff] %v2308
    %2344 = vst [vmem:[%s9 + $0x20] sm:$0xff] %v2311
    %2345 = vst [vmem:[%s9 + $0x28] sm:$0xff] %v2313
    %2346 = vst [vmem:[%s9 + $0x30] sm:$0xff] %v2316
    %2347 = vst [vmem:[%s9 + $0x38] sm:$0xff] %v2318
    %2348 = vst [vmem:[%s9 + $0x40] sm:$0xff] %v2321
    %2349 = vst [vmem:[%s9 + $0x48] sm:$0xff] %v2323
    %2350 = vst [vmem:[%s9 + $0x50] sm:$0xff] %v2326
    %2351 = vst [vmem:[%s9 + $0x58] sm:$0xff] %v2328
    %2352 = vst [vmem:[%s9 + $0x60] sm:$0xff] %v2331
    %2353 = vst [vmem:[%s9 + $0x68] sm:$0xff] %v2333
    %2354 = vst [vmem:[%s9 + $0x70] sm:$0xff] %v2336
    %2355 = vst [vmem:[%s9 + $0x78] sm:$0xff] %v2338
    // Predicated region
    $region46: #{_forward_impl.1} parent=1 // pred_check
      _
    $region47: #{_forward_impl.1} parent=1 // pred_check_branch
      %2357 = sbr.rel (0) target = $region49
    $region48: #{_forward_impl.1} parent=1 // pred_region
      _
    $region49: #{_forward_impl.1} parent=1 // pred_fallthru
      _
    // Predicated region
    $region50: #{_forward_impl.1} parent=1 // pred_check
      _
    $region51: #{_forward_impl.1} parent=1 // pred_check_branch
      %2359 = sbr.rel (0) target = $region53
    $region52: #{_forward_impl.1} parent=1 // pred_region
      _
    $region53: #{_forward_impl.1} parent=1 // pred_fallthru
      _
    %2360 = vsyncpa [#allocation3], 1
    %2361 = vsyncpa [#allocation5], 1

</llo_original>
